<compile_context>
chip_gen: v7x
topology: tpu7x:2x2x1
jax: 0.10.0
libtpu: 0.0.40
codegen_flags: <defaults>
</compile_context>

<pallas_src>
import jax
import jax.numpy as jnp
from jax.experimental import pallas as pl
from jax.experimental.pallas import tpu as pltpu

_BN_EPS = 1e-5

# Lane-dense dimensions of the fused pipeline.
_K0 = 784   # 28*28*1 input pixels (no pad: 8-sublane aligned, full last dim)
_D1 = 512   # 14*14*2 = 392 layer-1 outputs, padded to 4*128 lanes
_D2 = 256   # 7*7*4  = 196 layer-2 outputs, padded to 2*128 lanes
_D3 = 128   # 1*1*8  =   8 layer-3 outputs, padded to 1*128 lanes


def _round_up(x, m):
    return ((x + m - 1) // m) * m


# ----------------------------- Pallas kernel ------------------------------ #
def _encoder_kernel(x_ref, w1_ref, b1_ref, w2_ref, b2_ref, w3_ref, b3_ref,
                    o_ref):
    # x_ref : (TB, 784) bf16 flattened input pixels (NHWC order, C == 1)
    # w*_ref: bf16 conv-as-dense weights with eval-mode BN scale folded in
    # b*_ref: (1, D)  f32 folded BN shift per output column
    # o_ref : (TB, 128) f32 lane-dense output; first 8 columns are valid
    h = jnp.dot(x_ref[...], w1_ref[...], preferred_element_type=jnp.float32)
    h = h + b1_ref[...]
    h = jnp.where(h >= 0.0, h, 0.01 * h)                    # LeakyReLU(0.01)

    h = jnp.dot(h.astype(jnp.bfloat16), w2_ref[...],
                preferred_element_type=jnp.float32)
    h = h + b2_ref[...]
    h = jnp.where(h >= 0.0, h, 0.01 * h)                    # LeakyReLU(0.01)

    h = jnp.dot(h.astype(jnp.bfloat16), w3_ref[...],
                preferred_element_type=jnp.float32)
    h = h + b3_ref[...]
    # Sigmoid: exp and the approximate reciprocal both run on the EUP slot.
    o_ref[...] = pl.reciprocal(1.0 + jnp.exp(-h), approx=True).astype(o_ref.dtype)


# --------------------- weight preprocessing (wrapper) ---------------------- #
def _conv_to_dense(w, in_hw, stride, pad):
    """Dense matrix of a Conv2d: maps flattened NHWC input -> flattened NHWC
    output.  w is the PyTorch weight (Cout, Cin, KH, KW)."""
    cout, cin, kh, kw = w.shape
    hin, win = in_hw
    ho = (hin + 2 * pad - kh) // stride + 1
    wo = (win + 2 * pad - kw) // stride + 1

    io, jo, ik, jk, ci, co = jnp.meshgrid(
        jnp.arange(ho), jnp.arange(wo), jnp.arange(kh), jnp.arange(kw),
        jnp.arange(cin), jnp.arange(cout), indexing="ij")
    hi = io * stride - pad + ik
    wi = jo * stride - pad + jk
    valid = (hi >= 0) & (hi < hin) & (wi >= 0) & (wi < win)

    vals = jnp.where(valid, w[co, ci, ik, jk].astype(jnp.float32), 0.0)
    row = (hi * win + wi) * cin + ci            # flattened input index (h,w,c)
    col = (io * wo + jo) * cout + co            # flattened output index (h,w,c)
    row = jnp.clip(row, 0, hin * win * cin - 1)  # invalid taps carry value 0

    dense = jnp.zeros((hin * win * cin, ho * wo * cout), jnp.float32)
    dense = dense.at[row.ravel(), col.ravel()].add(vals.ravel())
    return dense, ho, wo


def _fold_layer(w, gamma, beta, rmean, rvar, in_hw, stride, pad):
    """Conv -> dense matrix, with eval-mode BN folded into scale/bias."""
    dense, oh, ow = _conv_to_dense(w, in_hw, stride, pad)
    scale = gamma / jnp.sqrt(rvar + _BN_EPS)
    shift = beta - rmean * scale
    scale_cols = jnp.tile(scale, oh * ow)       # column order is (h, w, c)
    shift_cols = jnp.tile(shift, oh * ow)
    return dense * scale_cols[None, :], shift_cols, (oh, ow)


def _pad_to(a, shape):
    return jnp.pad(a, [(0, t - s) for s, t in zip(a.shape, shape)])


def fold_encoder_params(params):
    """Turn the per-layer conv/BN params into the fused kernel's operands."""
    (w1, g1, be1, m1, v1, _, s1, p1, _) = params[0]
    (w2, g2, be2, m2, v2, _, s2, p2, _) = params[1]
    (w3, g3, be3, m3, v3, _, s3, p3, _) = params[2]

    d1, sh1, hw1 = _fold_layer(w1, g1, be1, m1, v1, (28, 28), s1, p1)  # (784,392)
    d2, sh2, hw2 = _fold_layer(w2, g2, be2, m2, v2, hw1, s2, p2)       # (392,196)
    d3, sh3, _ = _fold_layer(w3, g3, be3, m3, v3, hw2, s3, p3)         # (196,  8)

    # Weights in bf16 (MXU-native, half the DMA); BN shifts stay f32.
    W1 = _pad_to(d1, (_K0, _D1)).astype(jnp.bfloat16)
    W2 = _pad_to(d2, (_D1, _D2)).astype(jnp.bfloat16)
    W3 = _pad_to(d3, (_D2, _D3)).astype(jnp.bfloat16)
    B1 = _pad_to(sh1[None, :], (1, _D1))
    B2 = _pad_to(sh2[None, :], (1, _D2))
    B3 = _pad_to(sh3[None, :], (1, _D3))
    return (W1, B1, W2, B2, W3, B3)


# ------------------------------ fused forward ------------------------------ #
@jax.jit
def encoder_forward(x_nchw, folded):
    W1, B1, W2, B2, W3, B3 = folded
    n = x_nchw.shape[0]
    # NCHW -> NHWC -> flatten per image (h, w, c); C == 1 for this encoder.
    # Cast to bf16 here (fused with this single reshape pass) -> half the
    # input DMA and bf16 MXU operands in the kernel.  No column/row padding.
    x = jnp.transpose(x_nchw, (0, 2, 3, 1)).reshape(n, -1).astype(jnp.bfloat16)
    assert x.shape[1] == _K0, x.shape

    # Batch tile: fill the 256-wide MXU M dim (v6e/v7x) and amortize the
    # per-grid-step overhead, but keep >=2 grid steps whenever n allows so
    # the "parallel" axis can split across v7x's two TensorCores.  For tiny
    # batches a single full-dim block (tb == n) avoids any padding.
    if n <= 32:
        tb = n                               # block == full array dim (legal)
    else:
        cap = 512 if n >= 2048 else 256
        tb = min(cap, _round_up(pl.cdiv(n, 2), 16))
    grid = (pl.cdiv(n, tb),)                 # partial last block handled by Pallas

    out = pl.pallas_call(
        _encoder_kernel,
        out_shape=jax.ShapeDtypeStruct((n, _D3), jnp.float32),
        grid=grid,
        in_specs=[
            pl.BlockSpec((tb, _K0), lambda i: (i, 0)),
            pl.BlockSpec((_K0, _D1), lambda i: (0, 0)),
            pl.BlockSpec((1, _D1), lambda i: (0, 0)),
            pl.BlockSpec((_D1, _D2), lambda i: (0, 0)),
            pl.BlockSpec((1, _D2), lambda i: (0, 0)),
            pl.BlockSpec((_D2, _D3), lambda i: (0, 0)),
            pl.BlockSpec((1, _D3), lambda i: (0, 0)),
        ],
        out_specs=pl.BlockSpec((tb, _D3), lambda i: (i, 0)),
        compiler_params=pltpu.CompilerParams(
            dimension_semantics=("parallel",)),
    )(x, W1, B1, W2, B2, W3, B3)

    # Valid channels are the first 8 lanes; spatial output is 1x1 -> NCHW.
    return out[:, :8].reshape(n, 8, 1, 1)


# ------------------------------ params init -------------------------------- #
def init_encoder_params(key):
    """Deterministic parameter init matching the PyTorch module's shapes."""
    params = []
    layer_cfg = [
        # (cin, cout, k, stride, pad, act)
        (1, 2, 4, 2, 1, "leaky_relu"),
        (2, 4, 4, 2, 1, "leaky_relu"),
        (4, 8, 7, 1, 0, "sigmoid"),
    ]
    for (cin, cout, k, s, p, act) in layer_cfg:
        key, wk = jax.random.split(key)
        w = 0.1 * jax.random.normal(wk, (cout, cin, k, k), dtype=jnp.float32)
        gamma = jnp.linspace(0.9, 1.1, cout, dtype=jnp.float32)
        beta = jnp.linspace(-0.05, 0.05, cout, dtype=jnp.float32)
        rmean = jnp.zeros((cout,), jnp.float32)
        rvar = jnp.ones((cout,), jnp.float32)
        params.append((w, gamma, beta, rmean, rvar, k, s, p, act))
    return params


# ---------------------------- pure-JAX reference --------------------------- #
def _encoder_reference(x_nchw, params):
    x = x_nchw.astype(jnp.float32)
    for (w, gamma, beta, rmean, rvar, k, s, p, act) in params:
        y = jax.lax.conv_general_dilated(
            x, w, window_strides=(s, s), padding=[(p, p), (p, p)],
            dimension_numbers=("NCHW", "OIHW", "NCHW"))
        scale = (gamma / jnp.sqrt(rvar + _BN_EPS)).reshape(1, -1, 1, 1)
        shift = (beta - rmean * gamma / jnp.sqrt(rvar + _BN_EPS)).reshape(1, -1, 1, 1)
        y = y * scale + shift
        if act == "leaky_relu":
            y = jnp.where(y >= 0.0, y, 0.01 * y)
        else:
            y = jax.nn.sigmoid(y)
        x = y
    return x


if __name__ == "__main__":
    key = jax.random.PRNGKey(0)
    pkey, xkey = jax.random.split(key)

    params = init_encoder_params(pkey)
    folded = fold_encoder_params(params)

    # Small MNIST-like batch: (N=2, C=1, H=28, W=28) NCHW, as the module implies.
    x = jax.random.normal(xkey, (2, 1, 28, 28), dtype=jnp.float32)

    out = jax.block_until_ready(encoder_forward(x, folded))
    ref = jax.block_until_ready(_encoder_reference(x, params))

    assert out.shape == (2, 8, 1, 1), out.shape
    # bf16 MXU operands -> loosened tolerance vs. the f32 lax-conv reference.
    assert jnp.allclose(out, ref, atol=2e-2, rtol=2e-2), "mismatch vs reference"

    print("KERNEL_OK")
</pallas_src>

<mosaic_0001>
module attributes {stable_mosaic.version = 11 : i64} {
  func.func @_encoder_kernel(%arg0: i32, %arg1: memref<2x784xbf16, #tpu.memory_space<vmem>>, %arg2: memref<784x512xbf16, #tpu.memory_space<vmem>>, %arg3: memref<1x512xf32, #tpu.memory_space<vmem>>, %arg4: memref<512x256xbf16, #tpu.memory_space<vmem>>, %arg5: memref<1x256xf32, #tpu.memory_space<vmem>>, %arg6: memref<256x128xbf16, #tpu.memory_space<vmem>>, %arg7: memref<1x128xf32, #tpu.memory_space<vmem>>, %arg8: memref<2x128xf32, #tpu.memory_space<vmem>>) attributes {dimension_semantics = [#tpu.dimension_semantics<parallel>], iteration_bounds = array<i64: 1>, scalar_prefetch = 0 : i64, scratch_operands = 0 : i64, tpu.core_type = #tpu.core_type<tc>, window_params = [{transform_indices = @transform_0, window_bounds = array<i64: 2, 784>}, {pipeline_mode = #tpu.pipeline_mode<synchronous>, transform_indices = @transform_1, window_bounds = array<i64: 784, 512>}, {pipeline_mode = #tpu.pipeline_mode<synchronous>, transform_indices = @transform_2, window_bounds = array<i64: 1, 512>}, {pipeline_mode = #tpu.pipeline_mode<synchronous>, transform_indices = @transform_3, window_bounds = array<i64: 512, 256>}, {pipeline_mode = #tpu.pipeline_mode<synchronous>, transform_indices = @transform_4, window_bounds = array<i64: 1, 256>}, {pipeline_mode = #tpu.pipeline_mode<synchronous>, transform_indices = @transform_5, window_bounds = array<i64: 256, 128>}, {pipeline_mode = #tpu.pipeline_mode<synchronous>, transform_indices = @transform_6, window_bounds = array<i64: 1, 128>}, {transform_indices = @transform_7, window_bounds = array<i64: 2, 128>}]} {
    %c0 = arith.constant 0 : index
    %c0_0 = arith.constant 0 : index
    %0 = vector.load %arg1[%c0, %c0_0] : memref<2x784xbf16, #tpu.memory_space<vmem>>, vector<2x784xbf16>
    %c0_1 = arith.constant 0 : index
    %c0_2 = arith.constant 0 : index
    %1 = vector.load %arg2[%c0_1, %c0_2] : memref<784x512xbf16, #tpu.memory_space<vmem>>, vector<784x512xbf16>
    %cst = arith.constant dense<0.000000e+00> : vector<2x512xf32>
    %2 = tpu.matmul %0, %1, %cst {dimension_numbers = #tpu.dot_dimension_numbers<[1], [0], [0], [1], [0, 0, 1, 1], [], []>} : vector<2x784xbf16>, vector<784x512xbf16>, vector<2x512xf32> -> vector<2x512xf32>
    %c0_3 = arith.constant 0 : index
    %c0_4 = arith.constant 0 : index
    %3 = vector.load %arg3[%c0_3, %c0_4] : memref<1x512xf32, #tpu.memory_space<vmem>>, vector<1x512xf32>
    %4 = vector.broadcast %3 : vector<1x512xf32> to vector<2x512xf32>
    %5 = arith.addf %2, %4 : vector<2x512xf32>
    %cst_5 = arith.constant 0.000000e+00 : f32
    %6 = vector.broadcast %cst_5 : f32 to vector<2x512xf32>
    %7 = arith.cmpf oge, %5, %6 : vector<2x512xf32>
    %cst_6 = arith.constant 0.00999999977 : f32
    %8 = vector.broadcast %cst_6 : f32 to vector<2x512xf32>
    %9 = arith.mulf %8, %5 : vector<2x512xf32>
    %10 = arith.select %7, %5, %9 : vector<2x512xi1>, vector<2x512xf32>
    %11 = arith.truncf %10 : vector<2x512xf32> to vector<2x512xbf16>
    %c0_7 = arith.constant 0 : index
    %c0_8 = arith.constant 0 : index
    %12 = vector.load %arg4[%c0_7, %c0_8] : memref<512x256xbf16, #tpu.memory_space<vmem>>, vector<512x256xbf16>
    %cst_9 = arith.constant dense<0.000000e+00> : vector<2x256xf32>
    %13 = tpu.matmul %11, %12, %cst_9 {dimension_numbers = #tpu.dot_dimension_numbers<[1], [0], [0], [1], [0, 0, 1, 1], [], []>} : vector<2x512xbf16>, vector<512x256xbf16>, vector<2x256xf32> -> vector<2x256xf32>
    %c0_10 = arith.constant 0 : index
    %c0_11 = arith.constant 0 : index
    %14 = vector.load %arg5[%c0_10, %c0_11] : memref<1x256xf32, #tpu.memory_space<vmem>>, vector<1x256xf32>
    %15 = vector.broadcast %14 : vector<1x256xf32> to vector<2x256xf32>
    %16 = arith.addf %13, %15 : vector<2x256xf32>
    %cst_12 = arith.constant 0.000000e+00 : f32
    %17 = vector.broadcast %cst_12 : f32 to vector<2x256xf32>
    %18 = arith.cmpf oge, %16, %17 : vector<2x256xf32>
    %cst_13 = arith.constant 0.00999999977 : f32
    %19 = vector.broadcast %cst_13 : f32 to vector<2x256xf32>
    %20 = arith.mulf %19, %16 : vector<2x256xf32>
    %21 = arith.select %18, %16, %20 : vector<2x256xi1>, vector<2x256xf32>
    %22 = arith.truncf %21 : vector<2x256xf32> to vector<2x256xbf16>
    %c0_14 = arith.constant 0 : index
    %c0_15 = arith.constant 0 : index
    %23 = vector.load %arg6[%c0_14, %c0_15] : memref<256x128xbf16, #tpu.memory_space<vmem>>, vector<256x128xbf16>
    %cst_16 = arith.constant dense<0.000000e+00> : vector<2x128xf32>
    %24 = tpu.matmul %22, %23, %cst_16 {dimension_numbers = #tpu.dot_dimension_numbers<[1], [0], [0], [1], [0, 0, 1, 1], [], []>} : vector<2x256xbf16>, vector<256x128xbf16>, vector<2x128xf32> -> vector<2x128xf32>
    %c0_17 = arith.constant 0 : index
    %c0_18 = arith.constant 0 : index
    %25 = vector.load %arg7[%c0_17, %c0_18] : memref<1x128xf32, #tpu.memory_space<vmem>>, vector<1x128xf32>
    %26 = vector.broadcast %25 : vector<1x128xf32> to vector<2x128xf32>
    %27 = arith.addf %24, %26 : vector<2x128xf32>
    %cst_19 = arith.constant 0.000000e+00 : f32
    %28 = vector.broadcast %cst_19 : f32 to vector<2x128xf32>
    %29 = arith.subf %28, %27 : vector<2x128xf32>
    %30 = math.exp %29 : vector<2x128xf32>
    %cst_20 = arith.constant 1.000000e+00 : f32
    %31 = vector.broadcast %cst_20 : f32 to vector<2x128xf32>
    %32 = arith.addf %31, %30 : vector<2x128xf32>
    %33 = tpu.reciprocal %32 {approx = true} : vector<2x128xf32> -> vector<2x128xf32>
    %c0_21 = arith.constant 0 : index
    %c0_22 = arith.constant 0 : index
    %34 = vector.load %arg8[%c0_21, %c0_22] : memref<2x128xf32, #tpu.memory_space<vmem>>, vector<2x128xf32>
    tpu.vector_store %arg8[%c0_21, %c0_22], %33 {strides = array<i32>} : memref<2x128xf32, #tpu.memory_space<vmem>>, vector<2x128xf32>,
    return
  }
  func.func @transform_0(%arg0: i32) -> (i32, i32) {
    %c0_i32 = arith.constant 0 : i32
    %c0_i32_0 = arith.constant 0 : i32
    return %arg0, %c0_i32 : i32, i32
  }
  func.func @transform_1(%arg0: i32) -> (i32, i32) {
    %c0_i32 = arith.constant 0 : i32
    %c0_i32_0 = arith.constant 0 : i32
    %c0_i32_1 = arith.constant 0 : i32
    return %c0_i32, %c0_i32_0 : i32, i32
  }
  func.func @transform_2(%arg0: i32) -> (i32, i32) {
    %c0_i32 = arith.constant 0 : i32
    %c0_i32_0 = arith.constant 0 : i32
    %c0_i32_1 = arith.constant 0 : i32
    return %c0_i32, %c0_i32_0 : i32, i32
  }
  func.func @transform_3(%arg0: i32) -> (i32, i32) {
    %c0_i32 = arith.constant 0 : i32
    %c0_i32_0 = arith.constant 0 : i32
    %c0_i32_1 = arith.constant 0 : i32
    return %c0_i32, %c0_i32_0 : i32, i32
  }
  func.func @transform_4(%arg0: i32) -> (i32, i32) {
    %c0_i32 = arith.constant 0 : i32
    %c0_i32_0 = arith.constant 0 : i32
    %c0_i32_1 = arith.constant 0 : i32
    return %c0_i32, %c0_i32_0 : i32, i32
  }
  func.func @transform_5(%arg0: i32) -> (i32, i32) {
    %c0_i32 = arith.constant 0 : i32
    %c0_i32_0 = arith.constant 0 : i32
    %c0_i32_1 = arith.constant 0 : i32
    return %c0_i32, %c0_i32_0 : i32, i32
  }
  func.func @transform_6(%arg0: i32) -> (i32, i32) {
    %c0_i32 = arith.constant 0 : i32
    %c0_i32_0 = arith.constant 0 : i32
    %c0_i32_1 = arith.constant 0 : i32
    return %c0_i32, %c0_i32_0 : i32, i32
  }
  func.func @transform_7(%arg0: i32) -> (i32, i32) {
    %c0_i32 = arith.constant 0 : i32
    %c0_i32_0 = arith.constant 0 : i32
    return %arg0, %c0_i32 : i32, i32
  }
}

</mosaic_0001>

<llo_original>
// kernel: encoder_forward.1
$region0: #{encoder_forward.1}
  #allocation0 [shape = 'u32[]', space=smem, size = 0x4, offset = 0x4, fixed_abs, tag = 'smem constant byte address 0x4 - core index']
  #allocation1 [shape = 'u32[144,128]{1,0:T(1,128)}', space=vmem, size = 0x12000, scoped, tag = 'internal scratch']
  %s0 = inlined_call_operand.vmem [shape: bf16[2,784], index: 0, kind: input, shape index: {}]
  %s1 = inlined_call_operand.hbm [shape: bf16[784,512], index: 1, kind: input, shape index: {}]
  %s2 = inlined_call_operand.vmem [shape: f32[1,512], index: 2, kind: input, shape index: {}]
  %s3 = inlined_call_operand.hbm [shape: bf16[512,256], index: 3, kind: input, shape index: {}]
  %s4 = inlined_call_operand.vmem [shape: f32[1,256], index: 4, kind: input, shape index: {}]
  %s5 = inlined_call_operand.vmem [shape: bf16[256,128], index: 5, kind: input, shape index: {}]
  %s6 = inlined_call_operand.vmem [shape: f32[1,128], index: 6, kind: input, shape index: {}]
  %s7 = inlined_call_operand.hbm [shape: f32[2,128], index: 7, kind: output, shape index: {}]
  %s8 = sld [smem:[#allocation0]]
  $region46: #{encoder_forward.1} parent=0
    _
  %s10 = ssub.s32 1, %s8
  %s11 = scalar_select 0, %s10, %s8
  $region1: #{encoder_forward.1} parent=0
    #allocation2 [shape = 'u8[802816]{0}', space=vmem, size = 0xc4000, scoped, tag = 'input window, operand 1, single buffered']
    #allocation3 [shape = 's32[1]{0}', space=sflag, size = 0x4, scoped, tag = 'scoped memory for encoder_forward.1']
    #allocation4 [shape = 's32[1]{0}', space=sflag, size = 0x4, scoped, tag = 'scoped memory for encoder_forward.1']
    #allocation5 [shape = 'u8[262144]{0}', space=vmem, size = 0x40000, scoped, tag = 'input window, operand 3, single buffered']
    #allocation6 [shape = 's32[1]{0}', space=sflag, size = 0x4, scoped, tag = 'scoped memory for encoder_forward.1']
    #allocation7 [shape = 'u8[1024]{0}', space=vmem, size = 0x400, scoped, tag = 'output window, operand 0, single buffered']
    %12 = vsyncpa [#allocation3], 0
    %13 = vsyncpa [#allocation6], 0
    %14 = vsyncpa [#allocation4], 0
    // Predicated region
    $region2: #{encoder_forward.1} parent=1 // pred_check
      _
    $region3: #{encoder_forward.1} parent=1 // pred_check_branch
      %16 = sbr.rel (0) target = $region5
    $region4: #{encoder_forward.1} parent=1 // pred_region
      _
    $region5: #{encoder_forward.1} parent=1 // pred_fallthru
      _
    // Predicated region
    $region6: #{encoder_forward.1} parent=1 // pred_check
      _
    $region7: #{encoder_forward.1} parent=1 // pred_check_branch
      %18 = sbr.rel (0) target = $region9
    $region8: #{encoder_forward.1} parent=1 // pred_region
      %s20 = ssub.s32 25088, 25088
      %21 = vsyncadd [#allocation3], %s20
      %s22 = sshll.u32 [#allocation2], 4
      %s23 = int_to_ptr.vmem [resolvable:$true] %s22
      %28 = dma.hbm_to_vmem [thread:$0]  %s1, 25088, %s23, [#allocation3], 256, 256, 16
    $region9: #{encoder_forward.1} parent=1 // pred_fallthru
      _
    // Predicated region
    $region10: #{encoder_forward.1} parent=1 // pred_check
      _
    $region11: #{encoder_forward.1} parent=1 // pred_check_branch
      %30 = sbr.rel (0) target = $region13
    $region12: #{encoder_forward.1} parent=1 // pred_region
      _
    $region13: #{encoder_forward.1} parent=1 // pred_fallthru
      _
    // Predicated region
    $region14: #{encoder_forward.1} parent=1 // pred_check
      _
    $region15: #{encoder_forward.1} parent=1 // pred_check_branch
      %32 = sbr.rel (0) target = $region17
    $region16: #{encoder_forward.1} parent=1 // pred_region
      %s34 = ssub.s32 8192, 8192
      %35 = vsyncadd [#allocation6], %s34
      %s36 = sshll.u32 [#allocation5], 4
      %s37 = int_to_ptr.vmem [resolvable:$true] %s36
      %42 = dma.hbm_to_vmem [thread:$0]  %s3, 8192, %s37, [#allocation6], 128, 128, 8
    $region17: #{encoder_forward.1} parent=1 // pred_fallthru
      _
    // Predicated region
    $region18: #{encoder_forward.1} parent=1 // pred_check
      _
    $region19: #{encoder_forward.1} parent=1 // pred_check_branch
      %44 = sbr.rel (0) target = $region21
    $region20: #{encoder_forward.1} parent=1 // pred_region
      _
    $region21: #{encoder_forward.1} parent=1 // pred_fallthru
      _
    // Predicated region
    $region22: #{encoder_forward.1} parent=1 // pred_check
      _
    $region23: #{encoder_forward.1} parent=1 // pred_check_branch
      %46 = sbr.rel (0) target = $region25
    $region24: #{encoder_forward.1} parent=1 // pred_region
      _
    $region25: #{encoder_forward.1} parent=1 // pred_fallthru
      _
    // Predicated region
    $region26: #{encoder_forward.1} parent=1 // pred_check
      _
    $region27: #{encoder_forward.1} parent=1 // pred_check_branch
      %48 = sbr.rel (0) target = $region29
    $region28: #{encoder_forward.1} parent=1 // pred_region
      _
    $region29: #{encoder_forward.1} parent=1 // pred_fallthru
      _
    // Predicated region
    $region30: #{encoder_forward.1} parent=1 // pred_check
      _
    $region31: #{encoder_forward.1} parent=1 // pred_check_branch
      %50 = sbr.rel (0) target = $region33
    $region32: #{encoder_forward.1} parent=1 // pred_region
      %51 = dma.done [#allocation3], 25088
    $region33: #{encoder_forward.1} parent=1 // pred_fallthru
      _
    // Predicated region
    $region34: #{encoder_forward.1} parent=1 // pred_check
      _
    $region35: #{encoder_forward.1} parent=1 // pred_check_branch
      %53 = sbr.rel (0) target = $region37
    $region36: #{encoder_forward.1} parent=1 // pred_region
      %54 = dma.done [#allocation6], 8192
    $region37: #{encoder_forward.1} parent=1 // pred_fallthru
      _
    %v56 = vld [vmem:[%s0] sm:$0x7f]
    %v57 = vld [vmem:[#allocation2] sm:$0xff]
    %v58 = vld [vmem:[#allocation2 + $0x8] sm:$0xff]
    %v59 = vld [vmem:[#allocation2 + $0x10] sm:$0xff]
    %v60 = vld [vmem:[#allocation2 + $0x18] sm:$0xff]
    %v61 = vld [vmem:[#allocation2 + $0x20] sm:$0xff]
    %v62 = vld [vmem:[#allocation2 + $0x28] sm:$0xff]
    %v63 = vld [vmem:[#allocation2 + $0x30] sm:$0xff]
    %v64 = vld [vmem:[#allocation2 + $0x38] sm:$0xff]
    %v65 = vld [vmem:[#allocation2 + $0x40] sm:$0xff]
    %v66 = vld [vmem:[#allocation2 + $0x48] sm:$0xff]
    %v67 = vld [vmem:[#allocation2 + $0x50] sm:$0xff]
    %v68 = vld [vmem:[#allocation2 + $0x58] sm:$0xff]
    %v69 = vld [vmem:[#allocation2 + $0x60] sm:$0xff]
    %v70 = vld [vmem:[#allocation2 + $0x68] sm:$0xff]
    %v71 = vld [vmem:[#allocation2 + $0x70] sm:$0xff]
    %v72 = vld [vmem:[#allocation2 + $0x78] sm:$0xff]
    %v73 = vld [vmem:[#allocation2 + $0x80] sm:$0xff]
    %v74 = vld [vmem:[#allocation2 + $0x88] sm:$0xff]
    %v75 = vld [vmem:[#allocation2 + $0x90] sm:$0xff]
    %v76 = vld [vmem:[#allocation2 + $0x98] sm:$0xff]
    %v77 = vld [vmem:[#allocation2 + $0xa0] sm:$0xff]
    %v78 = vld [vmem:[#allocation2 + $0xa8] sm:$0xff]
    %v79 = vld [vmem:[#allocation2 + $0xb0] sm:$0xff]
    %v80 = vld [vmem:[#allocation2 + $0xb8] sm:$0xff]
    %v81 = vld [vmem:[#allocation2 + $0xc0] sm:$0xff]
    %v82 = vld [vmem:[#allocation2 + $0xc8] sm:$0xff]
    %v83 = vld [vmem:[#allocation2 + $0xd0] sm:$0xff]
    %v84 = vld [vmem:[#allocation2 + $0xd8] sm:$0xff]
    %v85 = vld [vmem:[#allocation2 + $0xe0] sm:$0xff]
    %v86 = vld [vmem:[#allocation2 + $0xe8] sm:$0xff]
    %v87 = vld [vmem:[#allocation2 + $0xf0] sm:$0xff]
    %v88 = vld [vmem:[#allocation2 + $0xf8] sm:$0xff]
    %v89 = vld [vmem:[#allocation2 + $0x100] sm:$0xff]
    %v90 = vld [vmem:[#allocation2 + $0x108] sm:$0xff]
    %v91 = vld [vmem:[#allocation2 + $0x110] sm:$0xff]
    %v92 = vld [vmem:[#allocation2 + $0x118] sm:$0xff]
    %v93 = vld [vmem:[#allocation2 + $0x120] sm:$0xff]
    %v94 = vld [vmem:[#allocation2 + $0x128] sm:$0xff]
    %v95 = vld [vmem:[#allocation2 + $0x130] sm:$0xff]
    %v96 = vld [vmem:[#allocation2 + $0x138] sm:$0xff]
    %v97 = vld [vmem:[#allocation2 + $0x140] sm:$0xff]
    %v98 = vld [vmem:[#allocation2 + $0x148] sm:$0xff]
    %v99 = vld [vmem:[#allocation2 + $0x150] sm:$0xff]
    %v100 = vld [vmem:[#allocation2 + $0x158] sm:$0xff]
    %v101 = vld [vmem:[#allocation2 + $0x160] sm:$0xff]
    %v102 = vld [vmem:[#allocation2 + $0x168] sm:$0xff]
    %v103 = vld [vmem:[#allocation2 + $0x170] sm:$0xff]
    %v104 = vld [vmem:[#allocation2 + $0x178] sm:$0xff]
    %v105 = vld [vmem:[#allocation2 + $0x180] sm:$0xff]
    %v106 = vld [vmem:[#allocation2 + $0x188] sm:$0xff]
    %v107 = vld [vmem:[#allocation2 + $0x190] sm:$0xff]
    %v108 = vld [vmem:[#allocation2 + $0x198] sm:$0xff]
    %v109 = vld [vmem:[#allocation2 + $0x1a0] sm:$0xff]
    %v110 = vld [vmem:[#allocation2 + $0x1a8] sm:$0xff]
    %v111 = vld [vmem:[#allocation2 + $0x1b0] sm:$0xff]
    %v112 = vld [vmem:[#allocation2 + $0x1b8] sm:$0xff]
    %v113 = vld [vmem:[#allocation2 + $0x1c0] sm:$0xff]
    %v114 = vld [vmem:[#allocation2 + $0x1c8] sm:$0xff]
    %v115 = vld [vmem:[#allocation2 + $0x1d0] sm:$0xff]
    %v116 = vld [vmem:[#allocation2 + $0x1d8] sm:$0xff]
    %v117 = vld [vmem:[#allocation2 + $0x1e0] sm:$0xff]
    %v118 = vld [vmem:[#allocation2 + $0x1e8] sm:$0xff]
    %v119 = vld [vmem:[#allocation2 + $0x1f0] sm:$0xff]
    %v120 = vld [vmem:[#allocation2 + $0x1f8] sm:$0xff]
    %v121 = vld [vmem:[#allocation2 + $0x200] sm:$0xff]
    %v122 = vld [vmem:[#allocation2 + $0x208] sm:$0xff]
    %v123 = vld [vmem:[#allocation2 + $0x210] sm:$0xff]
    %v124 = vld [vmem:[#allocation2 + $0x218] sm:$0xff]
    %v125 = vld [vmem:[#allocation2 + $0x220] sm:$0xff]
    %v126 = vld [vmem:[#allocation2 + $0x228] sm:$0xff]
    %v127 = vld [vmem:[#allocation2 + $0x230] sm:$0xff]
    %v128 = vld [vmem:[#allocation2 + $0x238] sm:$0xff]
    %v129 = vld [vmem:[#allocation2 + $0x240] sm:$0xff]
    %v130 = vld [vmem:[#allocation2 + $0x248] sm:$0xff]
    %v131 = vld [vmem:[#allocation2 + $0x250] sm:$0xff]
    %v132 = vld [vmem:[#allocation2 + $0x258] sm:$0xff]
    %v133 = vld [vmem:[#allocation2 + $0x260] sm:$0xff]
    %v134 = vld [vmem:[#allocation2 + $0x268] sm:$0xff]
    %v135 = vld [vmem:[#allocation2 + $0x270] sm:$0xff]
    %v136 = vld [vmem:[#allocation2 + $0x278] sm:$0xff]
    %v137 = vld [vmem:[#allocation2 + $0x280] sm:$0xff]
    %v138 = vld [vmem:[#allocation2 + $0x288] sm:$0xff]
    %v139 = vld [vmem:[#allocation2 + $0x290] sm:$0xff]
    %v140 = vld [vmem:[#allocation2 + $0x298] sm:$0xff]
    %v141 = vld [vmem:[#allocation2 + $0x2a0] sm:$0xff]
    %v142 = vld [vmem:[#allocation2 + $0x2a8] sm:$0xff]
    %v143 = vld [vmem:[#allocation2 + $0x2b0] sm:$0xff]
    %v144 = vld [vmem:[#allocation2 + $0x2b8] sm:$0xff]
    %v145 = vld [vmem:[#allocation2 + $0x2c0] sm:$0xff]
    %v146 = vld [vmem:[#allocation2 + $0x2c8] sm:$0xff]
    %v147 = vld [vmem:[#allocation2 + $0x2d0] sm:$0xff]
    %v148 = vld [vmem:[#allocation2 + $0x2d8] sm:$0xff]
    %v149 = vld [vmem:[#allocation2 + $0x2e0] sm:$0xff]
    %v150 = vld [vmem:[#allocation2 + $0x2e8] sm:$0xff]
    %v151 = vld [vmem:[#allocation2 + $0x2f0] sm:$0xff]
    %v152 = vld [vmem:[#allocation2 + $0x2f8] sm:$0xff]
    %v153 = vld [vmem:[#allocation2 + $0x300] sm:$0xff]
    %v154 = vld [vmem:[#allocation2 + $0x308] sm:$0xff]
    %v155 = vld [vmem:[#allocation2 + $0x310] sm:$0xff]
    %v156 = vld [vmem:[#allocation2 + $0x318] sm:$0xff]
    %v157 = vld [vmem:[#allocation2 + $0x320] sm:$0xff]
    %v158 = vld [vmem:[#allocation2 + $0x328] sm:$0xff]
    %v159 = vld [vmem:[#allocation2 + $0x330] sm:$0xff]
    %v160 = vld [vmem:[#allocation2 + $0x338] sm:$0xff]
    %v161 = vld [vmem:[#allocation2 + $0x340] sm:$0xff]
    %v162 = vld [vmem:[#allocation2 + $0x348] sm:$0xff]
    %v163 = vld [vmem:[#allocation2 + $0x350] sm:$0xff]
    %v164 = vld [vmem:[#allocation2 + $0x358] sm:$0xff]
    %v165 = vld [vmem:[#allocation2 + $0x360] sm:$0xff]
    %v166 = vld [vmem:[#allocation2 + $0x368] sm:$0xff]
    %v167 = vld [vmem:[#allocation2 + $0x370] sm:$0xff]
    %v168 = vld [vmem:[#allocation2 + $0x378] sm:$0xff]
    %v169 = vld [vmem:[#allocation2 + $0x380] sm:$0xff]
    %v170 = vld [vmem:[#allocation2 + $0x388] sm:$0xff]
    %v171 = vld [vmem:[#allocation2 + $0x390] sm:$0xff]
    %v172 = vld [vmem:[#allocation2 + $0x398] sm:$0xff]
    %v173 = vld [vmem:[#allocation2 + $0x3a0] sm:$0xff]
    %v174 = vld [vmem:[#allocation2 + $0x3a8] sm:$0xff]
    %v175 = vld [vmem:[#allocation2 + $0x3b0] sm:$0xff]
    %v176 = vld [vmem:[#allocation2 + $0x3b8] sm:$0xff]
    %v177 = vld [vmem:[#allocation2 + $0x3c0] sm:$0xff]
    %v178 = vld [vmem:[#allocation2 + $0x3c8] sm:$0xff]
    %v179 = vld [vmem:[#allocation2 + $0x3d0] sm:$0xff]
    %v180 = vld [vmem:[#allocation2 + $0x3d8] sm:$0xff]
    %v181 = vld [vmem:[#allocation2 + $0x3e0] sm:$0xff]
    %v182 = vld [vmem:[#allocation2 + $0x3e8] sm:$0xff]
    %v183 = vld [vmem:[#allocation2 + $0x3f0] sm:$0xff]
    %v184 = vld [vmem:[#allocation2 + $0x3f8] sm:$0xff]
    %v185 = vld [vmem:[#allocation2 + $0x400] sm:$0xff]
    %v186 = vld [vmem:[#allocation2 + $0x408] sm:$0xff]
    %v187 = vld [vmem:[#allocation2 + $0x410] sm:$0xff]
    %v188 = vld [vmem:[#allocation2 + $0x418] sm:$0xff]
    %v189 = vld [vmem:[#allocation2 + $0x420] sm:$0xff]
    %v190 = vld [vmem:[#allocation2 + $0x428] sm:$0xff]
    %v191 = vld [vmem:[#allocation2 + $0x430] sm:$0xff]
    %v192 = vld [vmem:[#allocation2 + $0x438] sm:$0xff]
    %v193 = vld [vmem:[#allocation2 + $0x440] sm:$0xff]
    %v194 = vld [vmem:[#allocation2 + $0x448] sm:$0xff]
    %v195 = vld [vmem:[#allocation2 + $0x450] sm:$0xff]
    %v196 = vld [vmem:[#allocation2 + $0x458] sm:$0xff]
    %v197 = vld [vmem:[#allocation2 + $0x460] sm:$0xff]
    %v198 = vld [vmem:[#allocation2 + $0x468] sm:$0xff]
    %v199 = vld [vmem:[#allocation2 + $0x470] sm:$0xff]
    %v200 = vld [vmem:[#allocation2 + $0x478] sm:$0xff]
    %v201 = vld [vmem:[#allocation2 + $0x480] sm:$0xff]
    %v202 = vld [vmem:[#allocation2 + $0x488] sm:$0xff]
    %v203 = vld [vmem:[#allocation2 + $0x490] sm:$0xff]
    %v204 = vld [vmem:[#allocation2 + $0x498] sm:$0xff]
    %v205 = vld [vmem:[#allocation2 + $0x4a0] sm:$0xff]
    %v206 = vld [vmem:[#allocation2 + $0x4a8] sm:$0xff]
    %v207 = vld [vmem:[#allocation2 + $0x4b0] sm:$0xff]
    %v208 = vld [vmem:[#allocation2 + $0x4b8] sm:$0xff]
    %v209 = vld [vmem:[#allocation2 + $0x4c0] sm:$0xff]
    %v210 = vld [vmem:[#allocation2 + $0x4c8] sm:$0xff]
    %v211 = vld [vmem:[#allocation2 + $0x4d0] sm:$0xff]
    %v212 = vld [vmem:[#allocation2 + $0x4d8] sm:$0xff]
    %v213 = vld [vmem:[#allocation2 + $0x4e0] sm:$0xff]
    %v214 = vld [vmem:[#allocation2 + $0x4e8] sm:$0xff]
    %v215 = vld [vmem:[#allocation2 + $0x4f0] sm:$0xff]
    %v216 = vld [vmem:[#allocation2 + $0x4f8] sm:$0xff]
    %v217 = vld [vmem:[#allocation2 + $0x500] sm:$0xff]
    %v218 = vld [vmem:[#allocation2 + $0x508] sm:$0xff]
    %v219 = vld [vmem:[#allocation2 + $0x510] sm:$0xff]
    %v220 = vld [vmem:[#allocation2 + $0x518] sm:$0xff]
    %v221 = vld [vmem:[#allocation2 + $0x520] sm:$0xff]
    %v222 = vld [vmem:[#allocation2 + $0x528] sm:$0xff]
    %v223 = vld [vmem:[#allocation2 + $0x530] sm:$0xff]
    %v224 = vld [vmem:[#allocation2 + $0x538] sm:$0xff]
    %v225 = vld [vmem:[#allocation2 + $0x540] sm:$0xff]
    %v226 = vld [vmem:[#allocation2 + $0x548] sm:$0xff]
    %v227 = vld [vmem:[#allocation2 + $0x550] sm:$0xff]
    %v228 = vld [vmem:[#allocation2 + $0x558] sm:$0xff]
    %v229 = vld [vmem:[#allocation2 + $0x560] sm:$0xff]
    %v230 = vld [vmem:[#allocation2 + $0x568] sm:$0xff]
    %v231 = vld [vmem:[#allocation2 + $0x570] sm:$0xff]
    %v232 = vld [vmem:[#allocation2 + $0x578] sm:$0xff]
    %v233 = vld [vmem:[#allocation2 + $0x580] sm:$0xff]
    %v234 = vld [vmem:[#allocation2 + $0x588] sm:$0xff]
    %v235 = vld [vmem:[#allocation2 + $0x590] sm:$0xff]
    %v236 = vld [vmem:[#allocation2 + $0x598] sm:$0xff]
    %v237 = vld [vmem:[#allocation2 + $0x5a0] sm:$0xff]
    %v238 = vld [vmem:[#allocation2 + $0x5a8] sm:$0xff]
    %v239 = vld [vmem:[#allocation2 + $0x5b0] sm:$0xff]
    %v240 = vld [vmem:[#allocation2 + $0x5b8] sm:$0xff]
    %v241 = vld [vmem:[#allocation2 + $0x5c0] sm:$0xff]
    %v242 = vld [vmem:[#allocation2 + $0x5c8] sm:$0xff]
    %v243 = vld [vmem:[#allocation2 + $0x5d0] sm:$0xff]
    %v244 = vld [vmem:[#allocation2 + $0x5d8] sm:$0xff]
    %v245 = vld [vmem:[#allocation2 + $0x5e0] sm:$0xff]
    %v246 = vld [vmem:[#allocation2 + $0x5e8] sm:$0xff]
    %v247 = vld [vmem:[#allocation2 + $0x5f0] sm:$0xff]
    %v248 = vld [vmem:[#allocation2 + $0x5f8] sm:$0xff]
    %v249 = vld [vmem:[#allocation2 + $0x600] sm:$0xff]
    %v250 = vld [vmem:[#allocation2 + $0x608] sm:$0xff]
    %v251 = vld [vmem:[#allocation2 + $0x610] sm:$0xff]
    %v252 = vld [vmem:[#allocation2 + $0x618] sm:$0xff]
    %v253 = vld [vmem:[%s2] sm:$0xf]
    %v255 = vlaneseq
    %v256 = vshrl.u32 %v255, 7
    %v257 = vsub.s32 0, %v256
    %v258 = vrot.slane %v253, %v257
    %v259 = vlaneseq
    %v260 = vshrl.u32 %v259, 7
    %v261 = vsub.s32 1, %v260
    %v262 = vrot.slane %v253, %v261
    %v263 = vlaneseq
    %v264 = vshrl.u32 %v263, 7
    %v265 = vsub.s32 2, %v264
    %v266 = vrot.slane %v253, %v265
    %v267 = vlaneseq
    %v268 = vshrl.u32 %v267, 7
    %v269 = vsub.s32 3, %v268
    %v270 = vrot.slane %v253, %v269
    %v276 = vcombine.high %v56, %v56
    %v278 = vunpack.c.l.s4 1966171168
    %v279 = vunpack.c.0.s8 %v278
    %v280 = vlaneseq
    %v281 = vshrl.u32 %v280, 7
    %v282 = vsub.s32 %v279, %v281
    %v283 = vrot.slane %v56, %v282
    %v285 = vunpack.c.l.s4 1966171168
    %v286 = vunpack.c.0.s8 %v285
    %v287 = vlaneseq
    %v288 = vshrl.u32 %v287, 7
    %v289 = vsub.s32 %v286, %v288
    %v290 = vrot.slane %v276, %v289
    %v291 = vcombine.high %v283, %v283
    %v292 = vcombine.high %v290, %v290
    %v294 = vunpack.c.l.s4 1966171168
    %v295 = vunpack.c.0.s8 %v294
    %v296 = vlaneseq
    %v297 = vshrl.u32 %v296, 7
    %v298 = vsub.s32 %v295, %v297
    %v299 = vrot.slane %v283, %v298
    %v301 = vunpack.c.l.s4 1966171168
    %v302 = vunpack.c.0.s8 %v301
    %v303 = vlaneseq
    %v304 = vshrl.u32 %v303, 7
    %v305 = vsub.s32 %v302, %v304
    %v306 = vrot.slane %v290, %v305
    %v308 = vunpack.c.l.s4 1966171168
    %v309 = vunpack.c.0.s8 %v308
    %v310 = vlaneseq
    %v311 = vshrl.u32 %v310, 7
    %v312 = vsub.s32 %v309, %v311
    %v313 = vrot.slane %v291, %v312
    %v315 = vunpack.c.l.s4 1966171168
    %v316 = vunpack.c.0.s8 %v315
    %v317 = vlaneseq
    %v318 = vshrl.u32 %v317, 7
    %v319 = vsub.s32 %v316, %v318
    %v320 = vrot.slane %v292, %v319
    %v321 = vcombine.high %v299, %v299
    %v322 = vcombine.high %v306, %v306
    %v323 = vcombine.high %v313, %v313
    %v526 = vunpack.c.l.b16 %v57
    %v527 = vunpack.c.h.b16 %v57
    %v528 = vunpack.c.l.b16 %v58
    %v529 = vunpack.c.h.b16 %v58
    %v530 = vunpack.c.l.b16 %v59
    %v531 = vunpack.c.h.b16 %v59
    %v532 = vunpack.c.l.b16 %v60
    %v533 = vunpack.c.h.b16 %v60
    %v534 = vunpack.c.l.b16 %v61
    %v535 = vunpack.c.h.b16 %v61
    %v536 = vunpack.c.l.b16 %v62
    %v537 = vunpack.c.h.b16 %v62
    %v538 = vunpack.c.l.b16 %v63
    %v539 = vunpack.c.h.b16 %v63
    %v540 = vunpack.c.l.b16 %v64
    %v541 = vunpack.c.h.b16 %v64
    %v542 = vunpack.c.l.b16 %v65
    %v543 = vunpack.c.h.b16 %v65
    %v544 = vunpack.c.l.b16 %v66
    %v545 = vunpack.c.h.b16 %v66
    %v546 = vunpack.c.l.b16 %v67
    %v547 = vunpack.c.h.b16 %v67
    %v548 = vunpack.c.l.b16 %v68
    %v549 = vunpack.c.h.b16 %v68
    %v550 = vunpack.c.l.b16 %v69
    %v551 = vunpack.c.h.b16 %v69
    %v552 = vunpack.c.l.b16 %v70
    %v553 = vunpack.c.h.b16 %v70
    %v554 = vunpack.c.l.b16 %v71
    %v555 = vunpack.c.h.b16 %v71
    %v556 = vunpack.c.l.b16 %v72
    %v557 = vunpack.c.h.b16 %v72
    %v558 = vunpack.c.l.b16 %v73
    %v559 = vunpack.c.h.b16 %v73
    %v560 = vunpack.c.l.b16 %v74
    %v561 = vunpack.c.h.b16 %v74
    %v562 = vunpack.c.l.b16 %v75
    %v563 = vunpack.c.h.b16 %v75
    %v564 = vunpack.c.l.b16 %v76
    %v565 = vunpack.c.h.b16 %v76
    %v566 = vunpack.c.l.b16 %v77
    %v567 = vunpack.c.h.b16 %v77
    %v568 = vunpack.c.l.b16 %v78
    %v569 = vunpack.c.h.b16 %v78
    %v570 = vunpack.c.l.b16 %v79
    %v571 = vunpack.c.h.b16 %v79
    %v572 = vunpack.c.l.b16 %v80
    %v573 = vunpack.c.h.b16 %v80
    %v574 = vunpack.c.l.b16 %v81
    %v575 = vunpack.c.h.b16 %v81
    %v576 = vunpack.c.l.b16 %v82
    %v577 = vunpack.c.h.b16 %v82
    %v578 = vunpack.c.l.b16 %v83
    %v579 = vunpack.c.h.b16 %v83
    %v580 = vunpack.c.l.b16 %v84
    %v581 = vunpack.c.h.b16 %v84
    %v582 = vunpack.c.l.b16 %v85
    %v583 = vunpack.c.h.b16 %v85
    %v584 = vunpack.c.l.b16 %v86
    %v585 = vunpack.c.h.b16 %v86
    %v586 = vunpack.c.l.b16 %v87
    %v587 = vunpack.c.h.b16 %v87
    %v588 = vunpack.c.l.b16 %v88
    %v589 = vunpack.c.h.b16 %v88
    %v590 = vunpack.c.l.b16 %v89
    %v591 = vunpack.c.h.b16 %v89
    %v592 = vunpack.c.l.b16 %v90
    %v593 = vunpack.c.h.b16 %v90
    %v594 = vunpack.c.l.b16 %v91
    %v595 = vunpack.c.h.b16 %v91
    %v596 = vunpack.c.l.b16 %v92
    %v597 = vunpack.c.h.b16 %v92
    %v598 = vunpack.c.l.b16 %v93
    %v599 = vunpack.c.h.b16 %v93
    %v600 = vunpack.c.l.b16 %v94
    %v601 = vunpack.c.h.b16 %v94
    %v602 = vunpack.c.l.b16 %v95
    %v603 = vunpack.c.h.b16 %v95
    %v604 = vunpack.c.l.b16 %v96
    %v605 = vunpack.c.h.b16 %v96
    %v606 = vunpack.c.l.b16 %v97
    %v607 = vunpack.c.h.b16 %v97
    %v608 = vunpack.c.l.b16 %v98
    %v609 = vunpack.c.h.b16 %v98
    %v610 = vunpack.c.l.b16 %v99
    %v611 = vunpack.c.h.b16 %v99
    %v612 = vunpack.c.l.b16 %v100
    %v613 = vunpack.c.h.b16 %v100
    %v614 = vunpack.c.l.b16 %v101
    %v615 = vunpack.c.h.b16 %v101
    %v616 = vunpack.c.l.b16 %v102
    %v617 = vunpack.c.h.b16 %v102
    %v618 = vunpack.c.l.b16 %v103
    %v619 = vunpack.c.h.b16 %v103
    %v620 = vunpack.c.l.b16 %v104
    %v621 = vunpack.c.h.b16 %v104
    %v622 = vunpack.c.l.b16 %v105
    %v623 = vunpack.c.h.b16 %v105
    %v624 = vunpack.c.l.b16 %v106
    %v625 = vunpack.c.h.b16 %v106
    %v626 = vunpack.c.l.b16 %v107
    %v627 = vunpack.c.h.b16 %v107
    %v628 = vunpack.c.l.b16 %v108
    %v629 = vunpack.c.h.b16 %v108
    %v630 = vunpack.c.l.b16 %v109
    %v631 = vunpack.c.h.b16 %v109
    %v632 = vunpack.c.l.b16 %v110
    %v633 = vunpack.c.h.b16 %v110
    %v634 = vunpack.c.l.b16 %v111
    %v635 = vunpack.c.h.b16 %v111
    %v636 = vunpack.c.l.b16 %v112
    %v637 = vunpack.c.h.b16 %v112
    %v638 = vunpack.c.l.b16 %v113
    %v639 = vunpack.c.h.b16 %v113
    %v640 = vunpack.c.l.b16 %v114
    %v641 = vunpack.c.h.b16 %v114
    %v642 = vunpack.c.l.b16 %v115
    %v643 = vunpack.c.h.b16 %v115
    %v644 = vunpack.c.l.b16 %v116
    %v645 = vunpack.c.h.b16 %v116
    %v646 = vunpack.c.l.b16 %v117
    %v647 = vunpack.c.h.b16 %v117
    %v648 = vunpack.c.l.b16 %v118
    %v649 = vunpack.c.h.b16 %v118
    %v650 = vunpack.c.l.b16 %v119
    %v651 = vunpack.c.h.b16 %v119
    %v652 = vunpack.c.l.b16 %v120
    %v653 = vunpack.c.h.b16 %v120
    %v654 = vunpack.c.l.b16 %v121
    %v655 = vunpack.c.h.b16 %v121
    %v656 = vunpack.c.l.b16 %v122
    %v657 = vunpack.c.h.b16 %v122
    %v658 = vunpack.c.l.b16 %v123
    %v659 = vunpack.c.h.b16 %v123
    %v660 = vunpack.c.l.b16 %v124
    %v661 = vunpack.c.h.b16 %v124
    %v662 = vunpack.c.l.b16 %v125
    %v663 = vunpack.c.h.b16 %v125
    %v664 = vunpack.c.l.b16 %v126
    %v665 = vunpack.c.h.b16 %v126
    %v666 = vunpack.c.l.b16 %v127
    %v667 = vunpack.c.h.b16 %v127
    %v668 = vunpack.c.l.b16 %v128
    %v669 = vunpack.c.h.b16 %v128
    %v670 = vunpack.c.l.b16 %v129
    %v671 = vunpack.c.h.b16 %v129
    %v672 = vunpack.c.l.b16 %v130
    %v673 = vunpack.c.h.b16 %v130
    %v674 = vunpack.c.l.b16 %v131
    %v675 = vunpack.c.h.b16 %v131
    %v676 = vunpack.c.l.b16 %v132
    %v677 = vunpack.c.h.b16 %v132
    %v678 = vunpack.c.l.b16 %v133
    %v679 = vunpack.c.h.b16 %v133
    %v680 = vunpack.c.l.b16 %v134
    %v681 = vunpack.c.h.b16 %v134
    %v682 = vunpack.c.l.b16 %v135
    %v683 = vunpack.c.h.b16 %v135
    %v684 = vunpack.c.l.b16 %v136
    %v685 = vunpack.c.h.b16 %v136
    %v686 = vunpack.c.l.b16 %v137
    %v687 = vunpack.c.h.b16 %v137
    %v688 = vunpack.c.l.b16 %v138
    %v689 = vunpack.c.h.b16 %v138
    %v690 = vunpack.c.l.b16 %v139
    %v691 = vunpack.c.h.b16 %v139
    %v692 = vunpack.c.l.b16 %v140
    %v693 = vunpack.c.h.b16 %v140
    %v694 = vunpack.c.l.b16 %v141
    %v695 = vunpack.c.h.b16 %v141
    %v696 = vunpack.c.l.b16 %v142
    %v697 = vunpack.c.h.b16 %v142
    %v698 = vunpack.c.l.b16 %v143
    %v699 = vunpack.c.h.b16 %v143
    %v700 = vunpack.c.l.b16 %v144
    %v701 = vunpack.c.h.b16 %v144
    %v702 = vunpack.c.l.b16 %v145
    %v703 = vunpack.c.h.b16 %v145
    %v704 = vunpack.c.l.b16 %v146
    %v705 = vunpack.c.h.b16 %v146
    %v706 = vunpack.c.l.b16 %v147
    %v707 = vunpack.c.h.b16 %v147
    %v708 = vunpack.c.l.b16 %v148
    %v709 = vunpack.c.h.b16 %v148
    %v710 = vunpack.c.l.b16 %v149
    %v711 = vunpack.c.h.b16 %v149
    %v712 = vunpack.c.l.b16 %v150
    %v713 = vunpack.c.h.b16 %v150
    %v714 = vunpack.c.l.b16 %v151
    %v715 = vunpack.c.h.b16 %v151
    %v716 = vunpack.c.l.b16 %v152
    %v717 = vunpack.c.h.b16 %v152
    %v718 = vunpack.c.l.b16 %v153
    %v719 = vunpack.c.h.b16 %v153
    %v720 = vunpack.c.l.b16 %v154
    %v721 = vunpack.c.h.b16 %v154
    %v722 = vunpack.c.l.b16 %v155
    %v723 = vunpack.c.h.b16 %v155
    %v724 = vunpack.c.l.b16 %v156
    %v725 = vunpack.c.h.b16 %v156
    %v726 = vunpack.c.l.b16 %v157
    %v727 = vunpack.c.h.b16 %v157
    %v728 = vunpack.c.l.b16 %v158
    %v729 = vunpack.c.h.b16 %v158
    %v730 = vunpack.c.l.b16 %v159
    %v731 = vunpack.c.h.b16 %v159
    %v732 = vunpack.c.l.b16 %v160
    %v733 = vunpack.c.h.b16 %v160
    %v734 = vunpack.c.l.b16 %v161
    %v735 = vunpack.c.h.b16 %v161
    %v736 = vunpack.c.l.b16 %v162
    %v737 = vunpack.c.h.b16 %v162
    %v738 = vunpack.c.l.b16 %v163
    %v739 = vunpack.c.h.b16 %v163
    %v740 = vunpack.c.l.b16 %v164
    %v741 = vunpack.c.h.b16 %v164
    %v742 = vunpack.c.l.b16 %v165
    %v743 = vunpack.c.h.b16 %v165
    %v744 = vunpack.c.l.b16 %v166
    %v745 = vunpack.c.h.b16 %v166
    %v746 = vunpack.c.l.b16 %v167
    %v747 = vunpack.c.h.b16 %v167
    %v748 = vunpack.c.l.b16 %v168
    %v749 = vunpack.c.h.b16 %v168
    %v750 = vunpack.c.l.b16 %v169
    %v751 = vunpack.c.h.b16 %v169
    %v752 = vunpack.c.l.b16 %v170
    %v753 = vunpack.c.h.b16 %v170
    %v754 = vunpack.c.l.b16 %v171
    %v755 = vunpack.c.h.b16 %v171
    %v756 = vunpack.c.l.b16 %v172
    %v757 = vunpack.c.h.b16 %v172
    %v758 = vunpack.c.l.b16 %v173
    %v759 = vunpack.c.h.b16 %v173
    %v760 = vunpack.c.l.b16 %v174
    %v761 = vunpack.c.h.b16 %v174
    %v762 = vunpack.c.l.b16 %v175
    %v763 = vunpack.c.h.b16 %v175
    %v764 = vunpack.c.l.b16 %v176
    %v765 = vunpack.c.h.b16 %v176
    %v766 = vunpack.c.l.b16 %v177
    %v767 = vunpack.c.h.b16 %v177
    %v768 = vunpack.c.l.b16 %v178
    %v769 = vunpack.c.h.b16 %v178
    %v770 = vunpack.c.l.b16 %v179
    %v771 = vunpack.c.h.b16 %v179
    %v772 = vunpack.c.l.b16 %v180
    %v773 = vunpack.c.h.b16 %v180
    %v774 = vunpack.c.l.b16 %v181
    %v775 = vunpack.c.h.b16 %v181
    %v776 = vunpack.c.l.b16 %v182
    %v777 = vunpack.c.h.b16 %v182
    %v778 = vunpack.c.l.b16 %v183
    %v779 = vunpack.c.h.b16 %v183
    %v780 = vunpack.c.l.b16 %v184
    %v781 = vunpack.c.h.b16 %v184
    %v782 = vunpack.c.l.b16 %v185
    %v783 = vunpack.c.h.b16 %v185
    %v784 = vunpack.c.l.b16 %v186
    %v785 = vunpack.c.h.b16 %v186
    %v786 = vunpack.c.l.b16 %v187
    %v787 = vunpack.c.h.b16 %v187
    %v788 = vunpack.c.l.b16 %v188
    %v789 = vunpack.c.h.b16 %v188
    %v790 = vunpack.c.l.b16 %v189
    %v791 = vunpack.c.h.b16 %v189
    %v792 = vunpack.c.l.b16 %v190
    %v793 = vunpack.c.h.b16 %v190
    %v794 = vunpack.c.l.b16 %v191
    %v795 = vunpack.c.h.b16 %v191
    %v796 = vunpack.c.l.b16 %v192
    %v797 = vunpack.c.h.b16 %v192
    %v798 = vunpack.c.l.b16 %v193
    %v799 = vunpack.c.h.b16 %v193
    %v800 = vunpack.c.l.b16 %v194
    %v801 = vunpack.c.h.b16 %v194
    %v802 = vunpack.c.l.b16 %v195
    %v803 = vunpack.c.h.b16 %v195
    %v804 = vunpack.c.l.b16 %v196
    %v805 = vunpack.c.h.b16 %v196
    %v806 = vunpack.c.l.b16 %v197
    %v807 = vunpack.c.h.b16 %v197
    %v808 = vunpack.c.l.b16 %v198
    %v809 = vunpack.c.h.b16 %v198
    %v810 = vunpack.c.l.b16 %v199
    %v811 = vunpack.c.h.b16 %v199
    %v812 = vunpack.c.l.b16 %v200
    %v813 = vunpack.c.h.b16 %v200
    %v814 = vunpack.c.l.b16 %v201
    %v815 = vunpack.c.h.b16 %v201
    %v816 = vunpack.c.l.b16 %v202
    %v817 = vunpack.c.h.b16 %v202
    %v818 = vunpack.c.l.b16 %v203
    %v819 = vunpack.c.h.b16 %v203
    %v820 = vunpack.c.l.b16 %v204
    %v821 = vunpack.c.h.b16 %v204
    %v822 = vunpack.c.l.b16 %v205
    %v823 = vunpack.c.h.b16 %v205
    %v824 = vunpack.c.l.b16 %v206
    %v825 = vunpack.c.h.b16 %v206
    %v826 = vunpack.c.l.b16 %v207
    %v827 = vunpack.c.h.b16 %v207
    %v828 = vunpack.c.l.b16 %v208
    %v829 = vunpack.c.h.b16 %v208
    %v830 = vunpack.c.l.b16 %v209
    %v831 = vunpack.c.h.b16 %v209
    %v832 = vunpack.c.l.b16 %v210
    %v833 = vunpack.c.h.b16 %v210
    %v834 = vunpack.c.l.b16 %v211
    %v835 = vunpack.c.h.b16 %v211
    %v836 = vunpack.c.l.b16 %v212
    %v837 = vunpack.c.h.b16 %v212
    %v838 = vunpack.c.l.b16 %v213
    %v839 = vunpack.c.h.b16 %v213
    %v840 = vunpack.c.l.b16 %v214
    %v841 = vunpack.c.h.b16 %v214
    %v842 = vunpack.c.l.b16 %v215
    %v843 = vunpack.c.h.b16 %v215
    %v844 = vunpack.c.l.b16 %v216
    %v845 = vunpack.c.h.b16 %v216
    %v846 = vunpack.c.l.b16 %v217
    %v847 = vunpack.c.h.b16 %v217
    %v848 = vunpack.c.l.b16 %v218
    %v849 = vunpack.c.h.b16 %v218
    %v850 = vunpack.c.l.b16 %v219
    %v851 = vunpack.c.h.b16 %v219
    %v852 = vunpack.c.l.b16 %v220
    %v853 = vunpack.c.h.b16 %v220
    %v854 = vunpack.c.l.b16 %v221
    %v855 = vunpack.c.h.b16 %v221
    %v856 = vunpack.c.l.b16 %v222
    %v857 = vunpack.c.h.b16 %v222
    %v858 = vunpack.c.l.b16 %v223
    %v859 = vunpack.c.h.b16 %v223
    %v860 = vunpack.c.l.b16 %v224
    %v861 = vunpack.c.h.b16 %v224
    %v862 = vunpack.c.l.b16 %v225
    %v863 = vunpack.c.h.b16 %v225
    %v864 = vunpack.c.l.b16 %v226
    %v865 = vunpack.c.h.b16 %v226
    %v866 = vunpack.c.l.b16 %v227
    %v867 = vunpack.c.h.b16 %v227
    %v868 = vunpack.c.l.b16 %v228
    %v869 = vunpack.c.h.b16 %v228
    %v870 = vunpack.c.l.b16 %v229
    %v871 = vunpack.c.h.b16 %v229
    %v872 = vunpack.c.l.b16 %v230
    %v873 = vunpack.c.h.b16 %v230
    %v874 = vunpack.c.l.b16 %v231
    %v875 = vunpack.c.h.b16 %v231
    %v876 = vunpack.c.l.b16 %v232
    %v877 = vunpack.c.h.b16 %v232
    %v878 = vunpack.c.l.b16 %v233
    %v879 = vunpack.c.h.b16 %v233
    %v880 = vunpack.c.l.b16 %v234
    %v881 = vunpack.c.h.b16 %v234
    %v882 = vunpack.c.l.b16 %v235
    %v883 = vunpack.c.h.b16 %v235
    %v884 = vunpack.c.l.b16 %v236
    %v885 = vunpack.c.h.b16 %v236
    %v886 = vunpack.c.l.b16 %v237
    %v887 = vunpack.c.h.b16 %v237
    %v888 = vunpack.c.l.b16 %v238
    %v889 = vunpack.c.h.b16 %v238
    %v890 = vunpack.c.l.b16 %v239
    %v891 = vunpack.c.h.b16 %v239
    %v892 = vunpack.c.l.b16 %v240
    %v893 = vunpack.c.h.b16 %v240
    %v894 = vunpack.c.l.b16 %v241
    %v895 = vunpack.c.h.b16 %v241
    %v896 = vunpack.c.l.b16 %v242
    %v897 = vunpack.c.h.b16 %v242
    %v898 = vunpack.c.l.b16 %v243
    %v899 = vunpack.c.h.b16 %v243
    %v900 = vunpack.c.l.b16 %v244
    %v901 = vunpack.c.h.b16 %v244
    %v902 = vunpack.c.l.b16 %v245
    %v903 = vunpack.c.h.b16 %v245
    %v904 = vunpack.c.l.b16 %v246
    %v905 = vunpack.c.h.b16 %v246
    %v906 = vunpack.c.l.b16 %v247
    %v907 = vunpack.c.h.b16 %v247
    %v908 = vunpack.c.l.b16 %v248
    %v909 = vunpack.c.h.b16 %v248
    %v910 = vunpack.c.l.b16 %v249
    %v911 = vunpack.c.h.b16 %v249
    %v912 = vunpack.c.l.b16 %v250
    %v913 = vunpack.c.h.b16 %v250
    %v914 = vunpack.c.l.b16 %v251
    %v915 = vunpack.c.h.b16 %v251
    %v916 = vunpack.c.l.b16 %v252
    %v917 = vunpack.c.h.b16 %v252
    %v918 = vpack.c.b16 %v530, %v526
    %v919 = vpack.c.b16 %v531, %v527
    %v920 = vpack.c.b16 %v532, %v528
    %v921 = vpack.c.b16 %v533, %v529
    %v922 = vpack.c.b16 %v538, %v534
    %v923 = vpack.c.b16 %v539, %v535
    %v924 = vpack.c.b16 %v540, %v536
    %v925 = vpack.c.b16 %v541, %v537
    %v926 = vpack.c.b16 %v546, %v542
    %v927 = vpack.c.b16 %v547, %v543
    %v928 = vpack.c.b16 %v548, %v544
    %v929 = vpack.c.b16 %v549, %v545
    %v930 = vpack.c.b16 %v554, %v550
    %v931 = vpack.c.b16 %v555, %v551
    %v932 = vpack.c.b16 %v556, %v552
    %v933 = vpack.c.b16 %v557, %v553
    %v934 = vpack.c.b16 %v562, %v558
    %v935 = vpack.c.b16 %v563, %v559
    %v936 = vpack.c.b16 %v564, %v560
    %v937 = vpack.c.b16 %v565, %v561
    %v938 = vpack.c.b16 %v570, %v566
    %v939 = vpack.c.b16 %v571, %v567
    %v940 = vpack.c.b16 %v572, %v568
    %v941 = vpack.c.b16 %v573, %v569
    %v942 = vpack.c.b16 %v578, %v574
    %v943 = vpack.c.b16 %v579, %v575
    %v944 = vpack.c.b16 %v580, %v576
    %v945 = vpack.c.b16 %v581, %v577
    %v946 = vpack.c.b16 %v586, %v582
    %v947 = vpack.c.b16 %v587, %v583
    %v948 = vpack.c.b16 %v588, %v584
    %v949 = vpack.c.b16 %v589, %v585
    %v950 = vpack.c.b16 %v594, %v590
    %v951 = vpack.c.b16 %v595, %v591
    %v952 = vpack.c.b16 %v596, %v592
    %v953 = vpack.c.b16 %v597, %v593
    %v954 = vpack.c.b16 %v602, %v598
    %v955 = vpack.c.b16 %v603, %v599
    %v956 = vpack.c.b16 %v604, %v600
    %v957 = vpack.c.b16 %v605, %v601
    %v958 = vpack.c.b16 %v610, %v606
    %v959 = vpack.c.b16 %v611, %v607
    %v960 = vpack.c.b16 %v612, %v608
    %v961 = vpack.c.b16 %v613, %v609
    %v962 = vpack.c.b16 %v618, %v614
    %v963 = vpack.c.b16 %v619, %v615
    %v964 = vpack.c.b16 %v620, %v616
    %v965 = vpack.c.b16 %v621, %v617
    %v966 = vpack.c.b16 %v626, %v622
    %v967 = vpack.c.b16 %v627, %v623
    %v968 = vpack.c.b16 %v628, %v624
    %v969 = vpack.c.b16 %v629, %v625
    %v970 = vpack.c.b16 %v634, %v630
    %v971 = vpack.c.b16 %v635, %v631
    %v972 = vpack.c.b16 %v636, %v632
    %v973 = vpack.c.b16 %v637, %v633
    %v974 = vpack.c.b16 %v642, %v638
    %v975 = vpack.c.b16 %v643, %v639
    %v976 = vpack.c.b16 %v644, %v640
    %v977 = vpack.c.b16 %v645, %v641
    %v978 = vpack.c.b16 %v650, %v646
    %v979 = vpack.c.b16 %v651, %v647
    %v980 = vpack.c.b16 %v652, %v648
    %v981 = vpack.c.b16 %v653, %v649
    %v982 = vpack.c.b16 %v658, %v654
    %v983 = vpack.c.b16 %v659, %v655
    %v984 = vpack.c.b16 %v660, %v656
    %v985 = vpack.c.b16 %v661, %v657
    %v986 = vpack.c.b16 %v666, %v662
    %v987 = vpack.c.b16 %v667, %v663
    %v988 = vpack.c.b16 %v668, %v664
    %v989 = vpack.c.b16 %v669, %v665
    %v990 = vpack.c.b16 %v674, %v670
    %v991 = vpack.c.b16 %v675, %v671
    %v992 = vpack.c.b16 %v676, %v672
    %v993 = vpack.c.b16 %v677, %v673
    %v994 = vpack.c.b16 %v682, %v678
    %v995 = vpack.c.b16 %v683, %v679
    %v996 = vpack.c.b16 %v684, %v680
    %v997 = vpack.c.b16 %v685, %v681
    %v998 = vpack.c.b16 %v690, %v686
    %v999 = vpack.c.b16 %v691, %v687
    %v1000 = vpack.c.b16 %v692, %v688
    %v1001 = vpack.c.b16 %v693, %v689
    %v1002 = vpack.c.b16 %v698, %v694
    %v1003 = vpack.c.b16 %v699, %v695
    %v1004 = vpack.c.b16 %v700, %v696
    %v1005 = vpack.c.b16 %v701, %v697
    %v1006 = vpack.c.b16 %v706, %v702
    %v1007 = vpack.c.b16 %v707, %v703
    %v1008 = vpack.c.b16 %v708, %v704
    %v1009 = vpack.c.b16 %v709, %v705
    %v1010 = vpack.c.b16 %v714, %v710
    %v1011 = vpack.c.b16 %v715, %v711
    %v1012 = vpack.c.b16 %v716, %v712
    %v1013 = vpack.c.b16 %v717, %v713
    %v1014 = vpack.c.b16 %v722, %v718
    %v1015 = vpack.c.b16 %v723, %v719
    %v1016 = vpack.c.b16 %v724, %v720
    %v1017 = vpack.c.b16 %v725, %v721
    %v1018 = vpack.c.b16 %v730, %v726
    %v1019 = vpack.c.b16 %v731, %v727
    %v1020 = vpack.c.b16 %v732, %v728
    %v1021 = vpack.c.b16 %v733, %v729
    %v1022 = vpack.c.b16 %v738, %v734
    %v1023 = vpack.c.b16 %v739, %v735
    %v1024 = vpack.c.b16 %v740, %v736
    %v1025 = vpack.c.b16 %v741, %v737
    %v1026 = vpack.c.b16 %v746, %v742
    %v1027 = vpack.c.b16 %v747, %v743
    %v1028 = vpack.c.b16 %v748, %v744
    %v1029 = vpack.c.b16 %v749, %v745
    %v1030 = vpack.c.b16 %v754, %v750
    %v1031 = vpack.c.b16 %v755, %v751
    %v1032 = vpack.c.b16 %v756, %v752
    %v1033 = vpack.c.b16 %v757, %v753
    %v1034 = vpack.c.b16 %v762, %v758
    %v1035 = vpack.c.b16 %v763, %v759
    %v1036 = vpack.c.b16 %v764, %v760
    %v1037 = vpack.c.b16 %v765, %v761
    %v1038 = vpack.c.b16 %v770, %v766
    %v1039 = vpack.c.b16 %v771, %v767
    %v1040 = vpack.c.b16 %v772, %v768
    %v1041 = vpack.c.b16 %v773, %v769
    %v1042 = vpack.c.b16 %v778, %v774
    %v1043 = vpack.c.b16 %v779, %v775
    %v1044 = vpack.c.b16 %v780, %v776
    %v1045 = vpack.c.b16 %v781, %v777
    %v1046 = vpack.c.b16 %v786, %v782
    %v1047 = vpack.c.b16 %v787, %v783
    %v1048 = vpack.c.b16 %v788, %v784
    %v1049 = vpack.c.b16 %v789, %v785
    %v1050 = vpack.c.b16 %v794, %v790
    %v1051 = vpack.c.b16 %v795, %v791
    %v1052 = vpack.c.b16 %v796, %v792
    %v1053 = vpack.c.b16 %v797, %v793
    %v1054 = vpack.c.b16 %v802, %v798
    %v1055 = vpack.c.b16 %v803, %v799
    %v1056 = vpack.c.b16 %v804, %v800
    %v1057 = vpack.c.b16 %v805, %v801
    %v1058 = vpack.c.b16 %v810, %v806
    %v1059 = vpack.c.b16 %v811, %v807
    %v1060 = vpack.c.b16 %v812, %v808
    %v1061 = vpack.c.b16 %v813, %v809
    %v1062 = vpack.c.b16 %v818, %v814
    %v1063 = vpack.c.b16 %v819, %v815
    %v1064 = vpack.c.b16 %v820, %v816
    %v1065 = vpack.c.b16 %v821, %v817
    %v1066 = vpack.c.b16 %v826, %v822
    %v1067 = vpack.c.b16 %v827, %v823
    %v1068 = vpack.c.b16 %v828, %v824
    %v1069 = vpack.c.b16 %v829, %v825
    %v1070 = vpack.c.b16 %v834, %v830
    %v1071 = vpack.c.b16 %v835, %v831
    %v1072 = vpack.c.b16 %v836, %v832
    %v1073 = vpack.c.b16 %v837, %v833
    %v1074 = vpack.c.b16 %v842, %v838
    %v1075 = vpack.c.b16 %v843, %v839
    %v1076 = vpack.c.b16 %v844, %v840
    %v1077 = vpack.c.b16 %v845, %v841
    %v1078 = vpack.c.b16 %v850, %v846
    %v1079 = vpack.c.b16 %v851, %v847
    %v1080 = vpack.c.b16 %v852, %v848
    %v1081 = vpack.c.b16 %v853, %v849
    %v1082 = vpack.c.b16 %v858, %v854
    %v1083 = vpack.c.b16 %v859, %v855
    %v1084 = vpack.c.b16 %v860, %v856
    %v1085 = vpack.c.b16 %v861, %v857
    %v1086 = vpack.c.b16 %v866, %v862
    %v1087 = vpack.c.b16 %v867, %v863
    %v1088 = vpack.c.b16 %v868, %v864
    %v1089 = vpack.c.b16 %v869, %v865
    %v1090 = vpack.c.b16 %v874, %v870
    %v1091 = vpack.c.b16 %v875, %v871
    %v1092 = vpack.c.b16 %v876, %v872
    %v1093 = vpack.c.b16 %v877, %v873
    %v1094 = vpack.c.b16 %v882, %v878
    %v1095 = vpack.c.b16 %v883, %v879
    %v1096 = vpack.c.b16 %v884, %v880
    %v1097 = vpack.c.b16 %v885, %v881
    %v1098 = vpack.c.b16 %v890, %v886
    %v1099 = vpack.c.b16 %v891, %v887
    %v1100 = vpack.c.b16 %v892, %v888
    %v1101 = vpack.c.b16 %v893, %v889
    %v1102 = vpack.c.b16 %v898, %v894
    %v1103 = vpack.c.b16 %v899, %v895
    %v1104 = vpack.c.b16 %v900, %v896
    %v1105 = vpack.c.b16 %v901, %v897
    %v1106 = vpack.c.b16 %v906, %v902
    %v1107 = vpack.c.b16 %v907, %v903
    %v1108 = vpack.c.b16 %v908, %v904
    %v1109 = vpack.c.b16 %v909, %v905
    %v1110 = vpack.c.b16 %v914, %v910
    %v1111 = vpack.c.b16 %v915, %v911
    %v1112 = vpack.c.b16 %v916, %v912
    %v1113 = vpack.c.b16 %v917, %v913
    %vm1310 = vcmask 130048
    %v1312 = vsel %vm1310, %v322, 0
    %1314 = vmatprep.subr.bf16.mxu0 %v919
    %1315 = vmatpush1.bf16.msra.mxu0 %v918
    %1316 = vmatprep.subr.bf16.mxu0 %v923
    %1317 = vmatpush1.bf16.msra.mxu0 %v922
    %1318 = vmatprep.subr.bf16.mxu0 %v927
    %1319 = vmatpush1.bf16.msra.mxu0 %v926
    %1320 = vmatprep.subr.bf16.mxu0 %v931
    %1321 = vmatpush1.bf16.msra.mxu0 %v930
    %1322 = vmatprep.subr.bf16.mxu0 %v935
    %1323 = vmatpush1.bf16.msra.mxu0 %v934
    %1324 = vmatprep.subr.bf16.mxu0 %v939
    %1325 = vmatpush1.bf16.msra.mxu0 %v938
    %1326 = vmatprep.subr.bf16.mxu0 %v943
    %1327 = vmatpush1.bf16.msra.mxu0 %v942
    %1328 = vmatprep.subr.bf16.mxu0 %v947
    %1329 = vmatpush1.bf16.msra.mxu0 %v946
    %1330 = vmatprep.subr.bf16.mxu0 %v951
    %1331 = vmatpush1.bf16.msra.mxu0 %v950
    %1332 = vmatprep.subr.bf16.mxu0 %v955
    %1333 = vmatpush1.bf16.msra.mxu0 %v954
    %1334 = vmatprep.subr.bf16.mxu0 %v959
    %1335 = vmatpush1.bf16.msra.mxu0 %v958
    %1336 = vmatprep.subr.bf16.mxu0 %v963
    %1337 = vmatpush1.bf16.msra.mxu0 %v962
    %1338 = vmatprep.subr.bf16.mxu0 %v967
    %1339 = vmatpush1.bf16.msra.mxu0 %v966
    %1340 = vmatprep.subr.bf16.mxu0 %v971
    %1341 = vmatpush1.bf16.msra.mxu0 %v970
    %1342 = vmatprep.subr.bf16.mxu0 %v975
    %1343 = vmatpush1.bf16.msra.mxu0 %v974
    %1344 = vmatprep.subr.bf16.mxu0 %v979
    %1345 = vmatpush1.bf16.msra.mxu0 %v978
    %1346 = vmatprep.mubr.bf16.mxu0 %v313
    %1347 = vmatmul.mubr.bf16.gmra.mrb[0].mxu0 %v299
    %v1348 = vpop.f32.mrb[0].mxu0
    %v1349 = vadd.f32 %v258, %v1348
    %v1350 = vpop.f32.mrb[0].mxu0
    %v1351 = vadd.f32 %v262, %v1350
    %v1352 = vpop.f32.mrb[0].mxu0
    %v1353 = vpop.f32.mrb[0].mxu0
    %1354 = vdwg.mxu0
    %1355 = vmatprep.subr.bf16.mxu0 %v983
    %1356 = vmatpush1.bf16.msra.mxu0 %v982
    %1357 = vmatprep.subr.bf16.mxu0 %v987
    %1358 = vmatpush1.bf16.msra.mxu0 %v986
    %1359 = vmatprep.subr.bf16.mxu0 %v991
    %1360 = vmatpush1.bf16.msra.mxu0 %v990
    %1361 = vmatprep.subr.bf16.mxu0 %v995
    %1362 = vmatpush1.bf16.msra.mxu0 %v994
    %1363 = vmatprep.subr.bf16.mxu0 %v999
    %1364 = vmatpush1.bf16.msra.mxu0 %v998
    %1365 = vmatprep.subr.bf16.mxu0 %v1003
    %1366 = vmatpush1.bf16.msra.mxu0 %v1002
    %1367 = vmatprep.subr.bf16.mxu0 %v1007
    %1368 = vmatpush1.bf16.msra.mxu0 %v1006
    %1369 = vmatprep.subr.bf16.mxu0 %v1011
    %1370 = vmatpush1.bf16.msra.mxu0 %v1010
    %1371 = vmatprep.subr.bf16.mxu0 %v1015
    %1372 = vmatpush1.bf16.msra.mxu0 %v1014
    %1373 = vmatprep.subr.bf16.mxu0 %v1019
    %1374 = vmatpush1.bf16.msra.mxu0 %v1018
    %1375 = vmatprep.subr.bf16.mxu0 %v1023
    %1376 = vmatpush1.bf16.msra.mxu0 %v1022
    %1377 = vmatprep.subr.bf16.mxu0 %v1027
    %1378 = vmatpush1.bf16.msra.mxu0 %v1026
    %1379 = vmatprep.subr.bf16.mxu0 %v1031
    %1380 = vmatpush1.bf16.msra.mxu0 %v1030
    %1381 = vmatprep.subr.bf16.mxu0 %v1035
    %1382 = vmatpush1.bf16.msra.mxu0 %v1034
    %1383 = vmatprep.subr.bf16.mxu0 %v1039
    %1384 = vmatpush1.bf16.msra.mxu0 %v1038
    %1385 = vmatprep.subr.bf16.mxu0 %v1043
    %1386 = vmatpush1.bf16.msra.mxu0 %v1042
    %1387 = vmatprep.mubr.bf16.mxu0 %v323
    %1388 = vmatmul.mubr.bf16.gmra.mrb[0].mxu0 %v321
    %v1389 = vpop.f32.mrb[0].mxu0
    %v1390 = vadd.f32 %v1349, %v1389
    %v1391 = vpop.f32.mrb[0].mxu0
    %v1392 = vadd.f32 %v1351, %v1391
    %v1393 = vpop.f32.mrb[0].mxu0
    %v1394 = vpop.f32.mrb[0].mxu0
    %1395 = vdwg.mxu0
    %1396 = vmatprep.subr.bf16.mxu0 %v1047
    %1397 = vmatpush1.bf16.msra.mxu0 %v1046
    %1398 = vmatprep.subr.bf16.mxu0 %v1051
    %1399 = vmatpush1.bf16.msra.mxu0 %v1050
    %1400 = vmatprep.subr.bf16.mxu0 %v1055
    %1401 = vmatpush1.bf16.msra.mxu0 %v1054
    %1402 = vmatprep.subr.bf16.mxu0 %v1059
    %1403 = vmatpush1.bf16.msra.mxu0 %v1058
    %1404 = vmatprep.subr.bf16.mxu0 %v1063
    %1405 = vmatpush1.bf16.msra.mxu0 %v1062
    %1406 = vmatprep.subr.bf16.mxu0 %v1067
    %1407 = vmatpush1.bf16.msra.mxu0 %v1066
    %1408 = vmatprep.subr.bf16.mxu0 %v1071
    %1409 = vmatpush1.bf16.msra.mxu0 %v1070
    %1410 = vmatprep.subr.bf16.mxu0 %v1075
    %1411 = vmatpush1.bf16.msra.mxu0 %v1074
    %1412 = vmatprep.subr.bf16.mxu0 %v1079
    %1413 = vmatpush1.bf16.msra.mxu0 %v1078
    %1414 = vmatprep.subr.bf16.mxu0 %v1083
    %1415 = vmatpush1.bf16.msra.mxu0 %v1082
    %1416 = vmatprep.subr.bf16.mxu0 %v1087
    %1417 = vmatpush1.bf16.msra.mxu0 %v1086
    %1418 = vmatprep.subr.bf16.mxu0 %v1091
    %1419 = vmatpush1.bf16.msra.mxu0 %v1090
    %1420 = vmatprep.subr.bf16.mxu0 %v1095
    %1421 = vmatpush1.bf16.msra.mxu0 %v1094
    %1422 = vmatprep.subr.bf16.mxu0 %v1099
    %1423 = vmatpush1.bf16.msra.mxu0 %v1098
    %1424 = vmatprep.subr.bf16.mxu0 %v1103
    %1425 = vmatpush1.bf16.msra.mxu0 %v1102
    %1426 = vmatprep.subr.bf16.mxu0 %v1107
    %1427 = vmatpush1.bf16.msra.mxu0 %v1106
    %1428 = vmatprep.mubr.bf16.mxu0 %v320
    %1429 = vmatmul.mubr.bf16.gmra.mrb[0].mxu0 %v306
    %v1430 = vpop.f32.mrb[0].mxu0
    %v1431 = vadd.f32 %v1390, %v1430
    %v1432 = vpop.f32.mrb[0].mxu0
    %v1433 = vadd.f32 %v1392, %v1432
    %v1434 = vpop.f32.mrb[0].mxu0
    %v1435 = vpop.f32.mrb[0].mxu0
    %1436 = vdwg.mxu0
    %1437 = vmatprep.subr.bf16.mxu0 %v1111
    %1438 = vmatpush1.bf16.msra.mxu0 %v1110
    %1439 = vmatprep.subr.bf16.mxu0 0
    %1440 = vmatpush1.bf16.msra.mxu0 0
    %1441 = vmatprep.subr.bf16.mxu0 0
    %1442 = vmatpush1.bf16.msra.mxu0 0
    %1443 = vmatprep.subr.bf16.mxu0 0
    %1444 = vmatpush1.bf16.msra.mxu0 0
    %1445 = vmatprep.subr.bf16.mxu0 0
    %1446 = vmatpush1.bf16.msra.mxu0 0
    %1447 = vmatprep.subr.bf16.mxu0 0
    %1448 = vmatpush1.bf16.msra.mxu0 0
    %1449 = vmatprep.subr.bf16.mxu0 0
    %1450 = vmatpush1.bf16.msra.mxu0 0
    %1451 = vmatprep.subr.bf16.mxu0 0
    %1452 = vmatpush1.bf16.msra.mxu0 0
    %1453 = vmatprep.subr.bf16.mxu0 0
    %1454 = vmatpush1.bf16.msra.mxu0 0
    %1455 = vmatprep.subr.bf16.mxu0 0
    %1456 = vmatpush1.bf16.msra.mxu0 0
    %1457 = vmatprep.subr.bf16.mxu0 0
    %1458 = vmatpush1.bf16.msra.mxu0 0
    %1459 = vmatprep.subr.bf16.mxu0 0
    %1460 = vmatpush1.bf16.msra.mxu0 0
    %1461 = vmatprep.subr.bf16.mxu0 0
    %1462 = vmatpush1.bf16.msra.mxu0 0
    %1463 = vmatprep.subr.bf16.mxu0 0
    %1464 = vmatpush1.bf16.msra.mxu0 0
    %1465 = vmatprep.subr.bf16.mxu0 0
    %1466 = vmatpush1.bf16.msra.mxu0 0
    %1467 = vmatprep.subr.bf16.mxu0 0
    %1468 = vmatpush1.bf16.msra.mxu0 0
    %1469 = vmatprep.mubr.bf16.mxu0 0
    %1470 = vmatmul.mubr.bf16.gmra.mrb[0].mxu0 %v1312
    %v1471 = vpop.f32.mrb[0].mxu0
    %v1472 = vadd.f32 %v1431, %v1471
    %v1473 = vpop.f32.mrb[0].mxu0
    %v1474 = vadd.f32 %v1433, %v1473
    %v1475 = vpop.f32.mrb[0].mxu0
    %v1476 = vpop.f32.mrb[0].mxu0
    %1477 = vdwg.mxu0
    %1478 = vmatprep.subr.bf16.mxu0 %v921
    %1479 = vmatpush1.bf16.msra.mxu0 %v920
    %1480 = vmatprep.subr.bf16.mxu0 %v925
    %1481 = vmatpush1.bf16.msra.mxu0 %v924
    %1482 = vmatprep.subr.bf16.mxu0 %v929
    %1483 = vmatpush1.bf16.msra.mxu0 %v928
    %1484 = vmatprep.subr.bf16.mxu0 %v933
    %1485 = vmatpush1.bf16.msra.mxu0 %v932
    %1486 = vmatprep.subr.bf16.mxu0 %v937
    %1487 = vmatpush1.bf16.msra.mxu0 %v936
    %1488 = vmatprep.subr.bf16.mxu0 %v941
    %1489 = vmatpush1.bf16.msra.mxu0 %v940
    %1490 = vmatprep.subr.bf16.mxu0 %v945
    %1491 = vmatpush1.bf16.msra.mxu0 %v944
    %1492 = vmatprep.subr.bf16.mxu0 %v949
    %1493 = vmatpush1.bf16.msra.mxu0 %v948
    %1494 = vmatprep.subr.bf16.mxu0 %v953
    %1495 = vmatpush1.bf16.msra.mxu0 %v952
    %1496 = vmatprep.subr.bf16.mxu0 %v957
    %1497 = vmatpush1.bf16.msra.mxu0 %v956
    %1498 = vmatprep.subr.bf16.mxu0 %v961
    %1499 = vmatpush1.bf16.msra.mxu0 %v960
    %1500 = vmatprep.subr.bf16.mxu0 %v965
    %1501 = vmatpush1.bf16.msra.mxu0 %v964
    %1502 = vmatprep.subr.bf16.mxu0 %v969
    %1503 = vmatpush1.bf16.msra.mxu0 %v968
    %1504 = vmatprep.subr.bf16.mxu0 %v973
    %1505 = vmatpush1.bf16.msra.mxu0 %v972
    %1506 = vmatprep.subr.bf16.mxu0 %v977
    %1507 = vmatpush1.bf16.msra.mxu0 %v976
    %1508 = vmatprep.subr.bf16.mxu0 %v981
    %1509 = vmatpush1.bf16.msra.mxu0 %v980
    %1510 = vmatprep.mubr.bf16.mxu0 %v313
    %1511 = vmatmul.mubr.bf16.gmra.mrb[0].mxu0 %v299
    %v1512 = vpop.f32.mrb[0].mxu0
    %v1513 = vadd.f32 %v266, %v1512
    %v1514 = vpop.f32.mrb[0].mxu0
    %v1515 = vadd.f32 %v270, %v1514
    %v1516 = vpop.f32.mrb[0].mxu0
    %v1517 = vpop.f32.mrb[0].mxu0
    %1518 = vdwg.mxu0
    %1519 = vmatprep.subr.bf16.mxu0 %v985
    %1520 = vmatpush1.bf16.msra.mxu0 %v984
    %1521 = vmatprep.subr.bf16.mxu0 %v989
    %1522 = vmatpush1.bf16.msra.mxu0 %v988
    %1523 = vmatprep.subr.bf16.mxu0 %v993
    %1524 = vmatpush1.bf16.msra.mxu0 %v992
    %1525 = vmatprep.subr.bf16.mxu0 %v997
    %1526 = vmatpush1.bf16.msra.mxu0 %v996
    %1527 = vmatprep.subr.bf16.mxu0 %v1001
    %1528 = vmatpush1.bf16.msra.mxu0 %v1000
    %1529 = vmatprep.subr.bf16.mxu0 %v1005
    %1530 = vmatpush1.bf16.msra.mxu0 %v1004
    %1531 = vmatprep.subr.bf16.mxu0 %v1009
    %1532 = vmatpush1.bf16.msra.mxu0 %v1008
    %1533 = vmatprep.subr.bf16.mxu0 %v1013
    %1534 = vmatpush1.bf16.msra.mxu0 %v1012
    %1535 = vmatprep.subr.bf16.mxu0 %v1017
    %1536 = vmatpush1.bf16.msra.mxu0 %v1016
    %1537 = vmatprep.subr.bf16.mxu0 %v1021
    %1538 = vmatpush1.bf16.msra.mxu0 %v1020
    %1539 = vmatprep.subr.bf16.mxu0 %v1025
    %1540 = vmatpush1.bf16.msra.mxu0 %v1024
    %1541 = vmatprep.subr.bf16.mxu0 %v1029
    %1542 = vmatpush1.bf16.msra.mxu0 %v1028
    %1543 = vmatprep.subr.bf16.mxu0 %v1033
    %1544 = vmatpush1.bf16.msra.mxu0 %v1032
    %1545 = vmatprep.subr.bf16.mxu0 %v1037
    %1546 = vmatpush1.bf16.msra.mxu0 %v1036
    %1547 = vmatprep.subr.bf16.mxu0 %v1041
    %1548 = vmatpush1.bf16.msra.mxu0 %v1040
    %1549 = vmatprep.subr.bf16.mxu0 %v1045
    %1550 = vmatpush1.bf16.msra.mxu0 %v1044
    %1551 = vmatprep.mubr.bf16.mxu0 %v323
    %1552 = vmatmul.mubr.bf16.gmra.mrb[0].mxu0 %v321
    %v1553 = vpop.f32.mrb[0].mxu0
    %v1554 = vadd.f32 %v1513, %v1553
    %v1555 = vpop.f32.mrb[0].mxu0
    %v1556 = vadd.f32 %v1515, %v1555
    %v1557 = vpop.f32.mrb[0].mxu0
    %v1558 = vpop.f32.mrb[0].mxu0
    %1559 = vdwg.mxu0
    %1560 = vmatprep.subr.bf16.mxu0 %v1049
    %1561 = vmatpush1.bf16.msra.mxu0 %v1048
    %1562 = vmatprep.subr.bf16.mxu0 %v1053
    %1563 = vmatpush1.bf16.msra.mxu0 %v1052
    %1564 = vmatprep.subr.bf16.mxu0 %v1057
    %1565 = vmatpush1.bf16.msra.mxu0 %v1056
    %1566 = vmatprep.subr.bf16.mxu0 %v1061
    %1567 = vmatpush1.bf16.msra.mxu0 %v1060
    %1568 = vmatprep.subr.bf16.mxu0 %v1065
    %1569 = vmatpush1.bf16.msra.mxu0 %v1064
    %1570 = vmatprep.subr.bf16.mxu0 %v1069
    %1571 = vmatpush1.bf16.msra.mxu0 %v1068
    %1572 = vmatprep.subr.bf16.mxu0 %v1073
    %1573 = vmatpush1.bf16.msra.mxu0 %v1072
    %1574 = vmatprep.subr.bf16.mxu0 %v1077
    %1575 = vmatpush1.bf16.msra.mxu0 %v1076
    %1576 = vmatprep.subr.bf16.mxu0 %v1081
    %1577 = vmatpush1.bf16.msra.mxu0 %v1080
    %1578 = vmatprep.subr.bf16.mxu0 %v1085
    %1579 = vmatpush1.bf16.msra.mxu0 %v1084
    %1580 = vmatprep.subr.bf16.mxu0 %v1089
    %1581 = vmatpush1.bf16.msra.mxu0 %v1088
    %1582 = vmatprep.subr.bf16.mxu0 %v1093
    %1583 = vmatpush1.bf16.msra.mxu0 %v1092
    %1584 = vmatprep.subr.bf16.mxu0 %v1097
    %1585 = vmatpush1.bf16.msra.mxu0 %v1096
    %1586 = vmatprep.subr.bf16.mxu0 %v1101
    %1587 = vmatpush1.bf16.msra.mxu0 %v1100
    %1588 = vmatprep.subr.bf16.mxu0 %v1105
    %1589 = vmatpush1.bf16.msra.mxu0 %v1104
    %1590 = vmatprep.subr.bf16.mxu0 %v1109
    %1591 = vmatpush1.bf16.msra.mxu0 %v1108
    %1592 = vmatprep.mubr.bf16.mxu0 %v320
    %1593 = vmatmul.mubr.bf16.gmra.mrb[0].mxu0 %v306
    %v1594 = vpop.f32.mrb[0].mxu0
    %v1595 = vadd.f32 %v1554, %v1594
    %v1596 = vpop.f32.mrb[0].mxu0
    %v1597 = vadd.f32 %v1556, %v1596
    %v1598 = vpop.f32.mrb[0].mxu0
    %v1599 = vpop.f32.mrb[0].mxu0
    %1600 = vdwg.mxu0
    %1601 = vmatprep.subr.bf16.mxu0 %v1113
    %1602 = vmatpush1.bf16.msra.mxu0 %v1112
    %1603 = vmatprep.subr.bf16.mxu0 0
    %1604 = vmatpush1.bf16.msra.mxu0 0
    %1605 = vmatprep.subr.bf16.mxu0 0
    %1606 = vmatpush1.bf16.msra.mxu0 0
    %1607 = vmatprep.subr.bf16.mxu0 0
    %1608 = vmatpush1.bf16.msra.mxu0 0
    %1609 = vmatprep.subr.bf16.mxu0 0
    %1610 = vmatpush1.bf16.msra.mxu0 0
    %1611 = vmatprep.subr.bf16.mxu0 0
    %1612 = vmatpush1.bf16.msra.mxu0 0
    %1613 = vmatprep.subr.bf16.mxu0 0
    %1614 = vmatpush1.bf16.msra.mxu0 0
    %1615 = vmatprep.subr.bf16.mxu0 0
    %1616 = vmatpush1.bf16.msra.mxu0 0
    %1617 = vmatprep.subr.bf16.mxu0 0
    %1618 = vmatpush1.bf16.msra.mxu0 0
    %1619 = vmatprep.subr.bf16.mxu0 0
    %1620 = vmatpush1.bf16.msra.mxu0 0
    %1621 = vmatprep.subr.bf16.mxu0 0
    %1622 = vmatpush1.bf16.msra.mxu0 0
    %1623 = vmatprep.subr.bf16.mxu0 0
    %1624 = vmatpush1.bf16.msra.mxu0 0
    %1625 = vmatprep.subr.bf16.mxu0 0
    %1626 = vmatpush1.bf16.msra.mxu0 0
    %1627 = vmatprep.subr.bf16.mxu0 0
    %1628 = vmatpush1.bf16.msra.mxu0 0
    %1629 = vmatprep.subr.bf16.mxu0 0
    %1630 = vmatpush1.bf16.msra.mxu0 0
    %1631 = vmatprep.subr.bf16.mxu0 0
    %1632 = vmatpush1.bf16.msra.mxu0 0
    %1633 = vmatprep.mubr.bf16.mxu0 0
    %1634 = vmatmul.mubr.bf16.gmra.mrb[0].mxu0 %v1312
    %v1635 = vpop.f32.mrb[0].mxu0
    %v1636 = vadd.f32 %v1595, %v1635
    %v1637 = vpop.f32.mrb[0].mxu0
    %v1638 = vadd.f32 %v1597, %v1637
    %v1639 = vpop.f32.mrb[0].mxu0
    %v1640 = vpop.f32.mrb[0].mxu0
    %1641 = vdwg.mxu0
    %vm1642 = vcmp.ge.f32.partialorder %v1472, 0.0
    %vm1643 = vcmp.ge.f32.partialorder %v1474, 0.0
    %vm1644 = vcmp.ge.f32.partialorder %v1636, 0.0
    %vm1645 = vcmp.ge.f32.partialorder %v1638, 0.0
    %v1646 = vmul.f32 %v1472, 0.01
    %v1647 = vmul.f32 %v1474, 0.01
    %v1648 = vmul.f32 %v1636, 0.01
    %v1649 = vmul.f32 %v1638, 0.01
    %v1650 = vsel %vm1642, %v1472, %v1646
    %v1651 = vsel %vm1643, %v1474, %v1647
    %v1652 = vsel %vm1644, %v1636, %v1648
    %v1653 = vsel %vm1645, %v1638, %v1649
    %v1654 = vpack.c.bf16 %v1650, %v1650
    %v1655 = vpack.c.bf16 %v1651, %v1651
    %v1656 = vpack.c.bf16 %v1652, %v1652
    %v1657 = vpack.c.bf16 %v1653, %v1653
    %v1658 = vld [vmem:[#allocation5] sm:$0xff]
    %v1659 = vld [vmem:[#allocation5 + $0x8] sm:$0xff]
    %v1660 = vld [vmem:[#allocation5 + $0x10] sm:$0xff]
    %v1661 = vld [vmem:[#allocation5 + $0x18] sm:$0xff]
    %v1662 = vld [vmem:[#allocation5 + $0x20] sm:$0xff]
    %v1663 = vld [vmem:[#allocation5 + $0x28] sm:$0xff]
    %v1664 = vld [vmem:[#allocation5 + $0x30] sm:$0xff]
    %v1665 = vld [vmem:[#allocation5 + $0x38] sm:$0xff]
    %v1666 = vld [vmem:[#allocation5 + $0x40] sm:$0xff]
    %v1667 = vld [vmem:[#allocation5 + $0x48] sm:$0xff]
    %v1668 = vld [vmem:[#allocation5 + $0x50] sm:$0xff]
    %v1669 = vld [vmem:[#allocation5 + $0x58] sm:$0xff]
    %v1670 = vld [vmem:[#allocation5 + $0x60] sm:$0xff]
    %v1671 = vld [vmem:[#allocation5 + $0x68] sm:$0xff]
    %v1672 = vld [vmem:[#allocation5 + $0x70] sm:$0xff]
    %v1673 = vld [vmem:[#allocation5 + $0x78] sm:$0xff]
    %v1674 = vld [vmem:[#allocation5 + $0x80] sm:$0xff]
    %v1675 = vld [vmem:[#allocation5 + $0x88] sm:$0xff]
    %v1676 = vld [vmem:[#allocation5 + $0x90] sm:$0xff]
    %v1677 = vld [vmem:[#allocation5 + $0x98] sm:$0xff]
    %v1678 = vld [vmem:[#allocation5 + $0xa0] sm:$0xff]
    %v1679 = vld [vmem:[#allocation5 + $0xa8] sm:$0xff]
    %v1680 = vld [vmem:[#allocation5 + $0xb0] sm:$0xff]
    %v1681 = vld [vmem:[#allocation5 + $0xb8] sm:$0xff]
    %v1682 = vld [vmem:[#allocation5 + $0xc0] sm:$0xff]
    %v1683 = vld [vmem:[#allocation5 + $0xc8] sm:$0xff]
    %v1684 = vld [vmem:[#allocation5 + $0xd0] sm:$0xff]
    %v1685 = vld [vmem:[#allocation5 + $0xd8] sm:$0xff]
    %v1686 = vld [vmem:[#allocation5 + $0xe0] sm:$0xff]
    %v1687 = vld [vmem:[#allocation5 + $0xe8] sm:$0xff]
    %v1688 = vld [vmem:[#allocation5 + $0xf0] sm:$0xff]
    %v1689 = vld [vmem:[#allocation5 + $0xf8] sm:$0xff]
    %v1690 = vld [vmem:[#allocation5 + $0x100] sm:$0xff]
    %v1691 = vld [vmem:[#allocation5 + $0x108] sm:$0xff]
    %v1692 = vld [vmem:[#allocation5 + $0x110] sm:$0xff]
    %v1693 = vld [vmem:[#allocation5 + $0x118] sm:$0xff]
    %v1694 = vld [vmem:[#allocation5 + $0x120] sm:$0xff]
    %v1695 = vld [vmem:[#allocation5 + $0x128] sm:$0xff]
    %v1696 = vld [vmem:[#allocation5 + $0x130] sm:$0xff]
    %v1697 = vld [vmem:[#allocation5 + $0x138] sm:$0xff]
    %v1698 = vld [vmem:[#allocation5 + $0x140] sm:$0xff]
    %v1699 = vld [vmem:[#allocation5 + $0x148] sm:$0xff]
    %v1700 = vld [vmem:[#allocation5 + $0x150] sm:$0xff]
    %v1701 = vld [vmem:[#allocation5 + $0x158] sm:$0xff]
    %v1702 = vld [vmem:[#allocation5 + $0x160] sm:$0xff]
    %v1703 = vld [vmem:[#allocation5 + $0x168] sm:$0xff]
    %v1704 = vld [vmem:[#allocation5 + $0x170] sm:$0xff]
    %v1705 = vld [vmem:[#allocation5 + $0x178] sm:$0xff]
    %v1706 = vld [vmem:[#allocation5 + $0x180] sm:$0xff]
    %v1707 = vld [vmem:[#allocation5 + $0x188] sm:$0xff]
    %v1708 = vld [vmem:[#allocation5 + $0x190] sm:$0xff]
    %v1709 = vld [vmem:[#allocation5 + $0x198] sm:$0xff]
    %v1710 = vld [vmem:[#allocation5 + $0x1a0] sm:$0xff]
    %v1711 = vld [vmem:[#allocation5 + $0x1a8] sm:$0xff]
    %v1712 = vld [vmem:[#allocation5 + $0x1b0] sm:$0xff]
    %v1713 = vld [vmem:[#allocation5 + $0x1b8] sm:$0xff]
    %v1714 = vld [vmem:[#allocation5 + $0x1c0] sm:$0xff]
    %v1715 = vld [vmem:[#allocation5 + $0x1c8] sm:$0xff]
    %v1716 = vld [vmem:[#allocation5 + $0x1d0] sm:$0xff]
    %v1717 = vld [vmem:[#allocation5 + $0x1d8] sm:$0xff]
    %v1718 = vld [vmem:[#allocation5 + $0x1e0] sm:$0xff]
    %v1719 = vld [vmem:[#allocation5 + $0x1e8] sm:$0xff]
    %v1720 = vld [vmem:[#allocation5 + $0x1f0] sm:$0xff]
    %v1721 = vld [vmem:[#allocation5 + $0x1f8] sm:$0xff]
    %v1722 = vld [vmem:[%s4] sm:$0x3]
    %v1724 = vlaneseq
    %v1725 = vshrl.u32 %v1724, 7
    %v1726 = vsub.s32 0, %v1725
    %v1727 = vrot.slane %v1722, %v1726
    %v1728 = vlaneseq
    %v1729 = vshrl.u32 %v1728, 7
    %v1730 = vsub.s32 1, %v1729
    %v1731 = vrot.slane %v1722, %v1730
    %v1798 = vunpack.c.l.b16 %v1658
    %v1799 = vunpack.c.h.b16 %v1658
    %v1800 = vunpack.c.l.b16 %v1659
    %v1801 = vunpack.c.h.b16 %v1659
    %v1802 = vunpack.c.l.b16 %v1660
    %v1803 = vunpack.c.h.b16 %v1660
    %v1804 = vunpack.c.l.b16 %v1661
    %v1805 = vunpack.c.h.b16 %v1661
    %v1806 = vunpack.c.l.b16 %v1662
    %v1807 = vunpack.c.h.b16 %v1662
    %v1808 = vunpack.c.l.b16 %v1663
    %v1809 = vunpack.c.h.b16 %v1663
    %v1810 = vunpack.c.l.b16 %v1664
    %v1811 = vunpack.c.h.b16 %v1664
    %v1812 = vunpack.c.l.b16 %v1665
    %v1813 = vunpack.c.h.b16 %v1665
    %v1814 = vunpack.c.l.b16 %v1666
    %v1815 = vunpack.c.h.b16 %v1666
    %v1816 = vunpack.c.l.b16 %v1667
    %v1817 = vunpack.c.h.b16 %v1667
    %v1818 = vunpack.c.l.b16 %v1668
    %v1819 = vunpack.c.h.b16 %v1668
    %v1820 = vunpack.c.l.b16 %v1669
    %v1821 = vunpack.c.h.b16 %v1669
    %v1822 = vunpack.c.l.b16 %v1670
    %v1823 = vunpack.c.h.b16 %v1670
    %v1824 = vunpack.c.l.b16 %v1671
    %v1825 = vunpack.c.h.b16 %v1671
    %v1826 = vunpack.c.l.b16 %v1672
    %v1827 = vunpack.c.h.b16 %v1672
    %v1828 = vunpack.c.l.b16 %v1673
    %v1829 = vunpack.c.h.b16 %v1673
    %v1830 = vunpack.c.l.b16 %v1674
    %v1831 = vunpack.c.h.b16 %v1674
    %v1832 = vunpack.c.l.b16 %v1675
    %v1833 = vunpack.c.h.b16 %v1675
    %v1834 = vunpack.c.l.b16 %v1676
    %v1835 = vunpack.c.h.b16 %v1676
    %v1836 = vunpack.c.l.b16 %v1677
    %v1837 = vunpack.c.h.b16 %v1677
    %v1838 = vunpack.c.l.b16 %v1678
    %v1839 = vunpack.c.h.b16 %v1678
    %v1840 = vunpack.c.l.b16 %v1679
    %v1841 = vunpack.c.h.b16 %v1679
    %v1842 = vunpack.c.l.b16 %v1680
    %v1843 = vunpack.c.h.b16 %v1680
    %v1844 = vunpack.c.l.b16 %v1681
    %v1845 = vunpack.c.h.b16 %v1681
    %v1846 = vunpack.c.l.b16 %v1682
    %v1847 = vunpack.c.h.b16 %v1682
    %v1848 = vunpack.c.l.b16 %v1683
    %v1849 = vunpack.c.h.b16 %v1683
    %v1850 = vunpack.c.l.b16 %v1684
    %v1851 = vunpack.c.h.b16 %v1684
    %v1852 = vunpack.c.l.b16 %v1685
    %v1853 = vunpack.c.h.b16 %v1685
    %v1854 = vunpack.c.l.b16 %v1686
    %v1855 = vunpack.c.h.b16 %v1686
    %v1856 = vunpack.c.l.b16 %v1687
    %v1857 = vunpack.c.h.b16 %v1687
    %v1858 = vunpack.c.l.b16 %v1688
    %v1859 = vunpack.c.h.b16 %v1688
    %v1860 = vunpack.c.l.b16 %v1689
    %v1861 = vunpack.c.h.b16 %v1689
    %v1862 = vunpack.c.l.b16 %v1690
    %v1863 = vunpack.c.h.b16 %v1690
    %v1864 = vunpack.c.l.b16 %v1691
    %v1865 = vunpack.c.h.b16 %v1691
    %v1866 = vunpack.c.l.b16 %v1692
    %v1867 = vunpack.c.h.b16 %v1692
    %v1868 = vunpack.c.l.b16 %v1693
    %v1869 = vunpack.c.h.b16 %v1693
    %v1870 = vunpack.c.l.b16 %v1694
    %v1871 = vunpack.c.h.b16 %v1694
    %v1872 = vunpack.c.l.b16 %v1695
    %v1873 = vunpack.c.h.b16 %v1695
    %v1874 = vunpack.c.l.b16 %v1696
    %v1875 = vunpack.c.h.b16 %v1696
    %v1876 = vunpack.c.l.b16 %v1697
    %v1877 = vunpack.c.h.b16 %v1697
    %v1878 = vunpack.c.l.b16 %v1698
    %v1879 = vunpack.c.h.b16 %v1698
    %v1880 = vunpack.c.l.b16 %v1699
    %v1881 = vunpack.c.h.b16 %v1699
    %v1882 = vunpack.c.l.b16 %v1700
    %v1883 = vunpack.c.h.b16 %v1700
    %v1884 = vunpack.c.l.b16 %v1701
    %v1885 = vunpack.c.h.b16 %v1701
    %v1886 = vunpack.c.l.b16 %v1702
    %v1887 = vunpack.c.h.b16 %v1702
    %v1888 = vunpack.c.l.b16 %v1703
    %v1889 = vunpack.c.h.b16 %v1703
    %v1890 = vunpack.c.l.b16 %v1704
    %v1891 = vunpack.c.h.b16 %v1704
    %v1892 = vunpack.c.l.b16 %v1705
    %v1893 = vunpack.c.h.b16 %v1705
    %v1894 = vunpack.c.l.b16 %v1706
    %v1895 = vunpack.c.h.b16 %v1706
    %v1896 = vunpack.c.l.b16 %v1707
    %v1897 = vunpack.c.h.b16 %v1707
    %v1898 = vunpack.c.l.b16 %v1708
    %v1899 = vunpack.c.h.b16 %v1708
    %v1900 = vunpack.c.l.b16 %v1709
    %v1901 = vunpack.c.h.b16 %v1709
    %v1902 = vunpack.c.l.b16 %v1710
    %v1903 = vunpack.c.h.b16 %v1710
    %v1904 = vunpack.c.l.b16 %v1711
    %v1905 = vunpack.c.h.b16 %v1711
    %v1906 = vunpack.c.l.b16 %v1712
    %v1907 = vunpack.c.h.b16 %v1712
    %v1908 = vunpack.c.l.b16 %v1713
    %v1909 = vunpack.c.h.b16 %v1713
    %v1910 = vunpack.c.l.b16 %v1714
    %v1911 = vunpack.c.h.b16 %v1714
    %v1912 = vunpack.c.l.b16 %v1715
    %v1913 = vunpack.c.h.b16 %v1715
    %v1914 = vunpack.c.l.b16 %v1716
    %v1915 = vunpack.c.h.b16 %v1716
    %v1916 = vunpack.c.l.b16 %v1717
    %v1917 = vunpack.c.h.b16 %v1717
    %v1918 = vunpack.c.l.b16 %v1718
    %v1919 = vunpack.c.h.b16 %v1718
    %v1920 = vunpack.c.l.b16 %v1719
    %v1921 = vunpack.c.h.b16 %v1719
    %v1922 = vunpack.c.l.b16 %v1720
    %v1923 = vunpack.c.h.b16 %v1720
    %v1924 = vunpack.c.l.b16 %v1721
    %v1925 = vunpack.c.h.b16 %v1721
    %v1926 = vpack.c.b16 %v1800, %v1798
    %v1927 = vpack.c.b16 %v1801, %v1799
    %v1928 = vpack.c.b16 %v1804, %v1802
    %v1929 = vpack.c.b16 %v1805, %v1803
    %v1930 = vpack.c.b16 %v1808, %v1806
    %v1931 = vpack.c.b16 %v1809, %v1807
    %v1932 = vpack.c.b16 %v1812, %v1810
    %v1933 = vpack.c.b16 %v1813, %v1811
    %v1934 = vpack.c.b16 %v1816, %v1814
    %v1935 = vpack.c.b16 %v1817, %v1815
    %v1936 = vpack.c.b16 %v1820, %v1818
    %v1937 = vpack.c.b16 %v1821, %v1819
    %v1938 = vpack.c.b16 %v1824, %v1822
    %v1939 = vpack.c.b16 %v1825, %v1823
    %v1940 = vpack.c.b16 %v1828, %v1826
    %v1941 = vpack.c.b16 %v1829, %v1827
    %v1942 = vpack.c.b16 %v1832, %v1830
    %v1943 = vpack.c.b16 %v1833, %v1831
    %v1944 = vpack.c.b16 %v1836, %v1834
    %v1945 = vpack.c.b16 %v1837, %v1835
    %v1946 = vpack.c.b16 %v1840, %v1838
    %v1947 = vpack.c.b16 %v1841, %v1839
    %v1948 = vpack.c.b16 %v1844, %v1842
    %v1949 = vpack.c.b16 %v1845, %v1843
    %v1950 = vpack.c.b16 %v1848, %v1846
    %v1951 = vpack.c.b16 %v1849, %v1847
    %v1952 = vpack.c.b16 %v1852, %v1850
    %v1953 = vpack.c.b16 %v1853, %v1851
    %v1954 = vpack.c.b16 %v1856, %v1854
    %v1955 = vpack.c.b16 %v1857, %v1855
    %v1956 = vpack.c.b16 %v1860, %v1858
    %v1957 = vpack.c.b16 %v1861, %v1859
    %v1958 = vpack.c.b16 %v1864, %v1862
    %v1959 = vpack.c.b16 %v1865, %v1863
    %v1960 = vpack.c.b16 %v1868, %v1866
    %v1961 = vpack.c.b16 %v1869, %v1867
    %v1962 = vpack.c.b16 %v1872, %v1870
    %v1963 = vpack.c.b16 %v1873, %v1871
    %v1964 = vpack.c.b16 %v1876, %v1874
    %v1965 = vpack.c.b16 %v1877, %v1875
    %v1966 = vpack.c.b16 %v1880, %v1878
    %v1967 = vpack.c.b16 %v1881, %v1879
    %v1968 = vpack.c.b16 %v1884, %v1882
    %v1969 = vpack.c.b16 %v1885, %v1883
    %v1970 = vpack.c.b16 %v1888, %v1886
    %v1971 = vpack.c.b16 %v1889, %v1887
    %v1972 = vpack.c.b16 %v1892, %v1890
    %v1973 = vpack.c.b16 %v1893, %v1891
    %v1974 = vpack.c.b16 %v1896, %v1894
    %v1975 = vpack.c.b16 %v1897, %v1895
    %v1976 = vpack.c.b16 %v1900, %v1898
    %v1977 = vpack.c.b16 %v1901, %v1899
    %v1978 = vpack.c.b16 %v1904, %v1902
    %v1979 = vpack.c.b16 %v1905, %v1903
    %v1980 = vpack.c.b16 %v1908, %v1906
    %v1981 = vpack.c.b16 %v1909, %v1907
    %v1982 = vpack.c.b16 %v1912, %v1910
    %v1983 = vpack.c.b16 %v1913, %v1911
    %v1984 = vpack.c.b16 %v1916, %v1914
    %v1985 = vpack.c.b16 %v1917, %v1915
    %v1986 = vpack.c.b16 %v1920, %v1918
    %v1987 = vpack.c.b16 %v1921, %v1919
    %v1988 = vpack.c.b16 %v1924, %v1922
    %v1989 = vpack.c.b16 %v1925, %v1923
    %2054 = vmatprep.subr.bf16.mxu0 %v1927
    %2055 = vmatpush1.bf16.msra.mxu0 %v1926
    %2056 = vmatprep.subr.bf16.mxu0 %v1929
    %2057 = vmatpush1.bf16.msra.mxu0 %v1928
    %2058 = vmatprep.subr.bf16.mxu0 %v1931
    %2059 = vmatpush1.bf16.msra.mxu0 %v1930
    %2060 = vmatprep.subr.bf16.mxu0 %v1933
    %2061 = vmatpush1.bf16.msra.mxu0 %v1932
    %2062 = vmatprep.subr.bf16.mxu0 %v1935
    %2063 = vmatpush1.bf16.msra.mxu0 %v1934
    %2064 = vmatprep.subr.bf16.mxu0 %v1937
    %2065 = vmatpush1.bf16.msra.mxu0 %v1936
    %2066 = vmatprep.subr.bf16.mxu0 %v1939
    %2067 = vmatpush1.bf16.msra.mxu0 %v1938
    %2068 = vmatprep.subr.bf16.mxu0 %v1941
    %2069 = vmatpush1.bf16.msra.mxu0 %v1940
    %2070 = vmatprep.subr.bf16.mxu0 %v1943
    %2071 = vmatpush1.bf16.msra.mxu0 %v1942
    %2072 = vmatprep.subr.bf16.mxu0 %v1945
    %2073 = vmatpush1.bf16.msra.mxu0 %v1944
    %2074 = vmatprep.subr.bf16.mxu0 %v1947
    %2075 = vmatpush1.bf16.msra.mxu0 %v1946
    %2076 = vmatprep.subr.bf16.mxu0 %v1949
    %2077 = vmatpush1.bf16.msra.mxu0 %v1948
    %2078 = vmatprep.subr.bf16.mxu0 %v1951
    %2079 = vmatpush1.bf16.msra.mxu0 %v1950
    %2080 = vmatprep.subr.bf16.mxu0 %v1953
    %2081 = vmatpush1.bf16.msra.mxu0 %v1952
    %2082 = vmatprep.subr.bf16.mxu0 %v1955
    %2083 = vmatpush1.bf16.msra.mxu0 %v1954
    %2084 = vmatprep.subr.bf16.mxu0 %v1957
    %2085 = vmatpush1.bf16.msra.mxu0 %v1956
    %2086 = vmatprep.mubr.bf16.mxu0 %v1655
    %2087 = vmatmul.mubr.bf16.gmra.mrb[0].mxu0 %v1654
    %v2088 = vpop.f32.mrb[0].mxu0
    %v2089 = vadd.f32 %v1727, %v2088
    %v2090 = vpop.f32.mrb[0].mxu0
    %v2091 = vadd.f32 %v1731, %v2090
    %v2092 = vpop.f32.mrb[0].mxu0
    %v2093 = vpop.f32.mrb[0].mxu0
    %2094 = vdwg.mxu0
    %2095 = vmatprep.subr.bf16.mxu0 %v1959
    %2096 = vmatpush1.bf16.msra.mxu0 %v1958
    %2097 = vmatprep.subr.bf16.mxu0 %v1961
    %2098 = vmatpush1.bf16.msra.mxu0 %v1960
    %2099 = vmatprep.subr.bf16.mxu0 %v1963
    %2100 = vmatpush1.bf16.msra.mxu0 %v1962
    %2101 = vmatprep.subr.bf16.mxu0 %v1965
    %2102 = vmatpush1.bf16.msra.mxu0 %v1964
    %2103 = vmatprep.subr.bf16.mxu0 %v1967
    %2104 = vmatpush1.bf16.msra.mxu0 %v1966
    %2105 = vmatprep.subr.bf16.mxu0 %v1969
    %2106 = vmatpush1.bf16.msra.mxu0 %v1968
    %2107 = vmatprep.subr.bf16.mxu0 %v1971
    %2108 = vmatpush1.bf16.msra.mxu0 %v1970
    %2109 = vmatprep.subr.bf16.mxu0 %v1973
    %2110 = vmatpush1.bf16.msra.mxu0 %v1972
    %2111 = vmatprep.subr.bf16.mxu0 %v1975
    %2112 = vmatpush1.bf16.msra.mxu0 %v1974
    %2113 = vmatprep.subr.bf16.mxu0 %v1977
    %2114 = vmatpush1.bf16.msra.mxu0 %v1976
    %2115 = vmatprep.subr.bf16.mxu0 %v1979
    %2116 = vmatpush1.bf16.msra.mxu0 %v1978
    %2117 = vmatprep.subr.bf16.mxu0 %v1981
    %2118 = vmatpush1.bf16.msra.mxu0 %v1980
    %2119 = vmatprep.subr.bf16.mxu0 %v1983
    %2120 = vmatpush1.bf16.msra.mxu0 %v1982
    %2121 = vmatprep.subr.bf16.mxu0 %v1985
    %2122 = vmatpush1.bf16.msra.mxu0 %v1984
    %2123 = vmatprep.subr.bf16.mxu0 %v1987
    %2124 = vmatpush1.bf16.msra.mxu0 %v1986
    %2125 = vmatprep.subr.bf16.mxu0 %v1989
    %2126 = vmatpush1.bf16.msra.mxu0 %v1988
    %2127 = vmatprep.mubr.bf16.mxu0 %v1657
    %2128 = vmatmul.mubr.bf16.gmra.mrb[0].mxu0 %v1656
    %v2129 = vpop.f32.mrb[0].mxu0
    %v2130 = vadd.f32 %v2089, %v2129
    %v2131 = vpop.f32.mrb[0].mxu0
    %v2132 = vadd.f32 %v2091, %v2131
    %v2133 = vpop.f32.mrb[0].mxu0
    %v2134 = vpop.f32.mrb[0].mxu0
    %2135 = vdwg.mxu0
    %vm2136 = vcmp.ge.f32.partialorder %v2130, 0.0
    %vm2137 = vcmp.ge.f32.partialorder %v2132, 0.0
    %v2138 = vmul.f32 %v2130, 0.01
    %v2139 = vmul.f32 %v2132, 0.01
    %v2140 = vsel %vm2136, %v2130, %v2138
    %v2141 = vsel %vm2137, %v2132, %v2139
    %v2142 = vpack.c.bf16 %v2140, %v2140
    %v2143 = vpack.c.bf16 %v2141, %v2141
    %v2144 = vld [vmem:[%s5] sm:$0xf]
    %v2145 = vld [vmem:[%s5 + $0x4] sm:$0xf]
    %v2146 = vld [vmem:[%s5 + $0x8] sm:$0xf]
    %v2147 = vld [vmem:[%s5 + $0xc] sm:$0xf]
    %v2148 = vld [vmem:[%s5 + $0x10] sm:$0xf]
    %v2149 = vld [vmem:[%s5 + $0x14] sm:$0xf]
    %v2150 = vld [vmem:[%s5 + $0x18] sm:$0xf]
    %v2151 = vld [vmem:[%s5 + $0x1c] sm:$0xf]
    %v2152 = vld [vmem:[%s5 + $0x20] sm:$0xf]
    %v2153 = vld [vmem:[%s5 + $0x24] sm:$0xf]
    %v2154 = vld [vmem:[%s5 + $0x28] sm:$0xf]
    %v2155 = vld [vmem:[%s5 + $0x2c] sm:$0xf]
    %v2156 = vld [vmem:[%s5 + $0x30] sm:$0xf]
    %v2157 = vld [vmem:[%s5 + $0x34] sm:$0xf]
    %v2158 = vld [vmem:[%s5 + $0x38] sm:$0xf]
    %v2159 = vld [vmem:[%s5 + $0x3c] sm:$0xf]
    %v2160 = vld [vmem:[%s5 + $0x40] sm:$0xf]
    %v2161 = vld [vmem:[%s5 + $0x44] sm:$0xf]
    %v2162 = vld [vmem:[%s5 + $0x48] sm:$0xf]
    %v2163 = vld [vmem:[%s5 + $0x4c] sm:$0xf]
    %v2164 = vld [vmem:[%s5 + $0x50] sm:$0xf]
    %v2165 = vld [vmem:[%s5 + $0x54] sm:$0xf]
    %v2166 = vld [vmem:[%s5 + $0x58] sm:$0xf]
    %v2167 = vld [vmem:[%s5 + $0x5c] sm:$0xf]
    %v2168 = vld [vmem:[%s5 + $0x60] sm:$0xf]
    %v2169 = vld [vmem:[%s5 + $0x64] sm:$0xf]
    %v2170 = vld [vmem:[%s5 + $0x68] sm:$0xf]
    %v2171 = vld [vmem:[%s5 + $0x6c] sm:$0xf]
    %v2172 = vld [vmem:[%s5 + $0x70] sm:$0xf]
    %v2173 = vld [vmem:[%s5 + $0x74] sm:$0xf]
    %v2174 = vld [vmem:[%s5 + $0x78] sm:$0xf]
    %v2175 = vld [vmem:[%s5 + $0x7c] sm:$0xf]
    %v2176 = vld [vmem:[%s6] sm:$0x1]
    %v2178 = vlaneseq
    %v2179 = vshrl.u32 %v2178, 7
    %v2180 = vsub.s32 0, %v2179
    %v2181 = vrot.slane %v2176, %v2180
    %v2215 = vunpack.c.l.b16 %v2144
    %v2216 = vunpack.c.l.b16 %v2145
    %v2217 = vunpack.c.l.b16 %v2146
    %v2218 = vunpack.c.l.b16 %v2147
    %v2219 = vunpack.c.l.b16 %v2148
    %v2220 = vunpack.c.l.b16 %v2149
    %v2221 = vunpack.c.l.b16 %v2150
    %v2222 = vunpack.c.l.b16 %v2151
    %v2223 = vunpack.c.l.b16 %v2152
    %v2224 = vunpack.c.l.b16 %v2153
    %v2225 = vunpack.c.l.b16 %v2154
    %v2226 = vunpack.c.l.b16 %v2155
    %v2227 = vunpack.c.l.b16 %v2156
    %v2228 = vunpack.c.l.b16 %v2157
    %v2229 = vunpack.c.l.b16 %v2158
    %v2230 = vunpack.c.l.b16 %v2159
    %v2231 = vunpack.c.l.b16 %v2160
    %v2232 = vunpack.c.l.b16 %v2161
    %v2233 = vunpack.c.l.b16 %v2162
    %v2234 = vunpack.c.l.b16 %v2163
    %v2235 = vunpack.c.l.b16 %v2164
    %v2236 = vunpack.c.l.b16 %v2165
    %v2237 = vunpack.c.l.b16 %v2166
    %v2238 = vunpack.c.l.b16 %v2167
    %v2239 = vunpack.c.l.b16 %v2168
    %v2240 = vunpack.c.l.b16 %v2169
    %v2241 = vunpack.c.l.b16 %v2170
    %v2242 = vunpack.c.l.b16 %v2171
    %v2243 = vunpack.c.l.b16 %v2172
    %v2244 = vunpack.c.l.b16 %v2173
    %v2245 = vunpack.c.l.b16 %v2174
    %v2246 = vunpack.c.l.b16 %v2175
    %v2247 = vpack.c.b16 %v2216, %v2215
    %v2248 = vpack.c.b16 %v2218, %v2217
    %v2249 = vpack.c.b16 %v2220, %v2219
    %v2250 = vpack.c.b16 %v2222, %v2221
    %v2251 = vpack.c.b16 %v2224, %v2223
    %v2252 = vpack.c.b16 %v2226, %v2225
    %v2253 = vpack.c.b16 %v2228, %v2227
    %v2254 = vpack.c.b16 %v2230, %v2229
    %v2255 = vpack.c.b16 %v2232, %v2231
    %v2256 = vpack.c.b16 %v2234, %v2233
    %v2257 = vpack.c.b16 %v2236, %v2235
    %v2258 = vpack.c.b16 %v2238, %v2237
    %v2259 = vpack.c.b16 %v2240, %v2239
    %v2260 = vpack.c.b16 %v2242, %v2241
    %v2261 = vpack.c.b16 %v2244, %v2243
    %v2262 = vpack.c.b16 %v2246, %v2245
    %2279 = vmatprep.subr.bf16.mxu0 0
    %2280 = vmatpush1.bf16.msra.mxu0 %v2247
    %2281 = vmatprep.subr.bf16.mxu0 0
    %2282 = vmatpush1.bf16.msra.mxu0 %v2248
    %2283 = vmatprep.subr.bf16.mxu0 0
    %2284 = vmatpush1.bf16.msra.mxu0 %v2249
    %2285 = vmatprep.subr.bf16.mxu0 0
    %2286 = vmatpush1.bf16.msra.mxu0 %v2250
    %2287 = vmatprep.subr.bf16.mxu0 0
    %2288 = vmatpush1.bf16.msra.mxu0 %v2251
    %2289 = vmatprep.subr.bf16.mxu0 0
    %2290 = vmatpush1.bf16.msra.mxu0 %v2252
    %2291 = vmatprep.subr.bf16.mxu0 0
    %2292 = vmatpush1.bf16.msra.mxu0 %v2253
    %2293 = vmatprep.subr.bf16.mxu0 0
    %2294 = vmatpush1.bf16.msra.mxu0 %v2254
    %2295 = vmatprep.subr.bf16.mxu0 0
    %2296 = vmatpush1.bf16.msra.mxu0 %v2255
    %2297 = vmatprep.subr.bf16.mxu0 0
    %2298 = vmatpush1.bf16.msra.mxu0 %v2256
    %2299 = vmatprep.subr.bf16.mxu0 0
    %2300 = vmatpush1.bf16.msra.mxu0 %v2257
    %2301 = vmatprep.subr.bf16.mxu0 0
    %2302 = vmatpush1.bf16.msra.mxu0 %v2258
    %2303 = vmatprep.subr.bf16.mxu0 0
    %2304 = vmatpush1.bf16.msra.mxu0 %v2259
    %2305 = vmatprep.subr.bf16.mxu0 0
    %2306 = vmatpush1.bf16.msra.mxu0 %v2260
    %2307 = vmatprep.subr.bf16.mxu0 0
    %2308 = vmatpush1.bf16.msra.mxu0 %v2261
    %2309 = vmatprep.subr.bf16.mxu0 0
    %2310 = vmatpush1.bf16.msra.mxu0 %v2262
    %2311 = vmatprep.mubr.bf16.mxu0 %v2143
    %2312 = vmatmul.mubr.bf16.gmra.mrb[0].mxu0 %v2142
    %v2313 = vpop.f32.mrb[0].mxu0
    %v2314 = vadd.f32 %v2181, %v2313
    %v2315 = vpop.f32.mrb[0].mxu0
    %v2316 = vpop.f32.mrb[0].mxu0
    %v2317 = vpop.f32.mrb[0].mxu0
    %2318 = vdwg.mxu0
    %v2319 = vsub.f32 0.0, %v2314
    %v2320 = vmul.f32 %v2319, 1.442695
    %v2321 = vpow.pop %v2320
    %v2322 = vadd.f32 %v2321, 1.0
    %v2323 = vrcp.pop %v2322
    %2324 = vst [vmem:[#allocation7] sm:$0x3] %v2323
    // Predicated region
    $region38: #{encoder_forward.1} parent=1 // pred_check
      _
    $region39: #{encoder_forward.1} parent=1 // pred_check_branch
      %2326 = sbr.rel (0) target = $region41
    $region40: #{encoder_forward.1} parent=1 // pred_region
      %s2328 = ssub.s32 32, 32
      %2329 = vsyncadd [#allocation4], %s2328
      %s2331 = sshll.u32 [#allocation7], 4
      %s2332 = int_to_ptr.vmem [resolvable:$true] %s2331
      %2334 = dma.vmem_to_hbm [thread:$0]  %s2332, 32, %s7, [#allocation4]
    $region41: #{encoder_forward.1} parent=1 // pred_fallthru
      _
    // Predicated region
    $region42: #{encoder_forward.1} parent=1 // pred_check
      _
    $region43: #{encoder_forward.1} parent=1 // pred_check_branch
      %2336 = sbr.rel (0) target = $region45
    $region44: #{encoder_forward.1} parent=1 // pred_region
      %2337 = dma.done [#allocation4], 32
    $region45: #{encoder_forward.1} parent=1 // pred_fallthru
      _
    %2338 = vsyncpa [#allocation3], 1
    %2339 = vsyncpa [#allocation6], 1
    %2340 = vsyncpa [#allocation4], 1

</llo_original>
